<compile_context>
chip_gen: v7x
topology: tpu7x:2x2x1
jax: 0.10.0
libtpu: 0.0.40
codegen_flags: <defaults>
</compile_context>

<pallas_src>
import jax
import jax.numpy as jnp
from jax.experimental import pallas as pl
from jax.experimental.pallas import tpu as pltpu


def _skipgram_kernel(ctx_idx_ref,    # SMEM (Bp, N) int32   [scalar prefetch]
                     ctx_table_ref,  # HBM  (V, D)  f32     [memory_space=ANY]
                     center_ref,     # VMEM (TB, L, D) f32
                     lens_ref,       # VMEM (TB, 1) int32
                     ow_ref,         # VMEM (TB, W) int32
                     out_ref,        # VMEM (1, 128) f32
                     slab_ref,       # VMEM (TB*N, D) f32 scratch (gather dst)
                     sem_ref):       # DMA semaphore (1,)
    tb, max_len, _ = center_ref.shape
    num_pos = ow_ref.shape[1]                     # W  (first W slots = positives)
    n_slots = slab_ref.shape[0] // tb             # N = (K+1)*W
    tile = pl.program_id(0)
    base_b = tile * tb

    # ---- 1. issue the HBM->VMEM row-gather DMAs for this batch tile --------
    @pl.loop(0, tb)
    def _gather_row(r):
        b = base_b + r
        dst_base = r * n_slots

        @pl.loop(0, n_slots)
        def _gather_slot(n):
            v = ctx_idx_ref[b, n]
            pltpu.make_async_copy(
                ctx_table_ref.at[pl.ds(v, 1)],
                slab_ref.at[pl.ds(dst_base + n, 1)],
                sem_ref.at[0],
            ).start()

    # ---- 2. mwe_f: masked mean pooling (overlaps the in-flight gather) -----
    center = center_ref[...]                                     # (TB, L, D)
    lens = lens_ref[...]                                         # (TB, 1) int32
    pos = jax.lax.broadcasted_iota(jnp.int32, (tb, max_len), 1)
    valid = (pos < lens).astype(jnp.float32)                     # (TB, L)
    lens_f = jnp.maximum(lens.astype(jnp.float32), 1.0)          # exact divide
    mwe = jnp.sum(center * valid[:, :, None], axis=1) / lens_f   # (TB, D) f32

    # ---- 3. wait for all gathered context rows ------------------------------
    @pl.loop(0, tb * n_slots)
    def _wait(_):
        pltpu.make_async_copy(
            ctx_table_ref.at[pl.ds(0, 1)],
            slab_ref.at[pl.ds(0, 1)],
            sem_ref.at[0],
        ).wait()

    # ---- 4. scores, softplus losses, pad mask, in-kernel tile reduction ----
    slab = slab_ref[...].reshape(tb, n_slots, -1)                # (TB, N, D)
    # VPU multiply + XLU lane reduce; slot n < num_pos is the positive slot.
    scores = jnp.sum(slab * mwe[:, None, :], axis=2)             # (TB, N) f32
    col = jax.lax.broadcasted_iota(jnp.int32, scores.shape, 1)
    signed = jnp.where(col < num_pos, -scores, scores)
    # stable softplus(x) = -logsigmoid(-x), lane-dense over the whole (TB, N)
    losses = jnp.maximum(signed, 0.0) + jnp.log1p(jnp.exp(-jnp.abs(signed)))
    mask_w = (ow_ref[...] != 0).astype(jnp.float32)              # (TB, W)
    mask_n = jnp.tile(mask_w, (1, n_slots // num_pos))           # (TB, N)
    tile_sum = jnp.sum(losses * mask_n)                          # scalar
    out_ref[...] = jnp.broadcast_to(tile_sum, out_ref.shape)     # (1, 128)


def mwe_skipgram_loss(center_table, context_table, center_words,
                      center_words_len, outside_words, negative_samples, *,
                      tile_b=8):
    """Forward pass of MWESkipGramTaskModel (returns the scalar loss)."""
    batch, max_len = center_words.shape
    _, window = outside_words.shape
    neg_k = negative_samples.shape[1]
    emb_d = context_table.shape[1]
    n_slots = (neg_k + 1) * window

    # Fused slot layout: n = k*W + w; k == 0 -> outside word (positive),
    # k >= 1 -> negative sample (k-1) drawn for outside position w.
    neg_idx = negative_samples.reshape(batch, window, neg_k)
    neg_idx = jnp.transpose(neg_idx, (0, 2, 1))                        # (B,K,W)
    ctx_idx = jnp.concatenate([outside_words[:, None, :], neg_idx], axis=1)
    ctx_idx = ctx_idx.reshape(batch, n_slots).astype(jnp.int32)        # (B, N)

    center_emb = center_table[center_words].astype(jnp.float32)        # (B,L,D)
    lens = center_words_len.astype(jnp.int32).reshape(batch, 1)        # (B, 1)
    ow = outside_words.astype(jnp.int32)                               # (B, W)

    # Pad the batch to a multiple of tile_b with fully-masked rows.
    pad_rows = (-batch) % tile_b
    if pad_rows:
        center_emb = jnp.pad(center_emb, ((0, pad_rows), (0, 0), (0, 0)))
        lens = jnp.pad(lens, ((0, pad_rows), (0, 0)), constant_values=1)
        ow = jnp.pad(ow, ((0, pad_rows), (0, 0)))        # 0 -> pad -> masked
        ctx_idx = jnp.pad(ctx_idx, ((0, pad_rows), (0, 0)))
    padded = batch + pad_rows
    num_tiles = padded // tile_b

    grid_spec = pltpu.PrefetchScalarGridSpec(
        num_scalar_prefetch=1,                 # ctx_idx -> SMEM
        grid=(num_tiles,),
        in_specs=[
            pl.BlockSpec(memory_space=pl.ANY),                         # table
            pl.BlockSpec((tile_b, max_len, emb_d), lambda i, ctx: (i, 0, 0)),
            pl.BlockSpec((tile_b, 1), lambda i, ctx: (i, 0)),
            pl.BlockSpec((tile_b, window), lambda i, ctx: (i, 0)),
        ],
        out_specs=pl.BlockSpec((1, 128), lambda i, ctx: (0, i)),
        scratch_shapes=[
            pltpu.VMEM((tile_b * n_slots, emb_d), jnp.float32),
            pltpu.SemaphoreType.DMA((1,)),
        ],
    )

    partials = pl.pallas_call(
        _skipgram_kernel,
        out_shape=jax.ShapeDtypeStruct((1, num_tiles * 128), jnp.float32),
        grid_spec=grid_spec,
        compiler_params=pltpu.CompilerParams(
            dimension_semantics=("parallel",),
            vmem_limit_bytes=32 * 1024 * 1024),
    )(ctx_idx, context_table.astype(jnp.float32), center_emb, lens, ow)

    loss_sum = jnp.sum(partials.reshape(num_tiles, 128)[:, 0])
    denom = jnp.maximum(jnp.sum((outside_words != 0).astype(jnp.float32)), 1.0)
    return loss_sum / denom


def reference_loss(center_table, context_table, center_words, center_words_len,
                   outside_words, negative_samples):
    """Pure-JAX f32 reference mirroring the torch forward (mean-pool mwe_f)."""
    b, w = outside_words.shape
    k = negative_samples.shape[1]
    ce = center_table[center_words].astype(jnp.float32)            # (B, L, D)
    lens = center_words_len.astype(jnp.float32)[:, None]
    max_len = ce.shape[1]
    valid = (jnp.arange(max_len)[None, :] < lens).astype(jnp.float32)
    mwe = jnp.sum(ce * valid[:, :, None], axis=1) / jnp.maximum(lens, 1.0)
    oe = context_table[outside_words].astype(jnp.float32)          # (B, W, D)
    ne = context_table[negative_samples].astype(jnp.float32).reshape(b, w, k, -1)
    pad_mask = (outside_words != 0).astype(jnp.float32)
    pos_score = jnp.sum(oe * mwe[:, None, :], axis=-1)
    pos_loss = -jax.nn.log_sigmoid(pos_score)
    neg_score = jnp.einsum('bwkd,bd->bwk', ne, mwe)
    neg_loss = jnp.sum(-jax.nn.log_sigmoid(-neg_score), axis=-1)
    total = (pos_loss + neg_loss) * pad_mask
    return jnp.sum(total) / jnp.maximum(jnp.sum(pad_mask), 1.0)


if __name__ == "__main__":
    key = jax.random.PRNGKey(0)
    k1, k2, k3, k4, k5, k6 = jax.random.split(key, 6)

    V = 64     # vocab size
    D = 128    # embedding dim (lane-dense)
    B = 32     # batch size -> 4 batch tiles of 8 (>= 2 grid steps per v7x TC)
    L = 4      # max_entity_length
    W = 8      # window_size * 2
    K = 8      # neg_sample_size

    # Deterministic "embedding_function" tables (f32, as in the torch module).
    center_table = jax.random.normal(k1, (V, D), dtype=jnp.float32) * 0.1
    context_table = jax.random.normal(k2, (V, D), dtype=jnp.float32) * 0.1

    # Inputs consistent with the torch forward signature (pad-free outside
    # words: the torch boolean-index path only runs pad-free; pads here are
    # handled by mask weighting with an identical result).
    center_words = jax.random.randint(k3, (B, L), 1, V)
    center_words_len = jax.random.randint(k4, (B,), 1, L + 1)
    outside_words = jax.random.randint(k5, (B, W), 1, V)
    negative_samples = jax.random.randint(k6, (B * W, K), 1, V)

    loss = mwe_skipgram_loss(center_table, context_table, center_words,
                             center_words_len, outside_words, negative_samples,
                             tile_b=8)
    loss = jax.block_until_ready(loss)

    ref = jax.block_until_ready(
        reference_loss(center_table, context_table, center_words,
                       center_words_len, outside_words, negative_samples))

    # Everything is f32 end-to-end now (exact divide, f32 scores) -> tight tol.
    assert jnp.allclose(loss, ref, rtol=1e-3, atol=1e-4), (loss, ref)

    print("KERNEL_OK")
</pallas_src>

<mosaic_0001>
module attributes {stable_mosaic.version = 11 : i64} {
  func.func @_skipgram_kernel(%arg0: i32, %arg1: memref<32x72xi32, #tpu.memory_space<smem>>, %arg2: memref<64x128xf32, #tpu.memory_space<any>>, %arg3: memref<8x4x128xf32, #tpu.memory_space<vmem>>, %arg4: memref<8x1xi32, #tpu.memory_space<vmem>>, %arg5: memref<8x8xi32, #tpu.memory_space<vmem>>, %arg6: memref<1x128xf32, #tpu.memory_space<vmem>>, %arg7: memref<576x128xf32, #tpu.memory_space<vmem>>, %arg8: memref<1x!tpu.dma_semaphore, #tpu.memory_space<semaphore_mem>>) attributes {dimension_semantics = [#tpu.dimension_semantics<parallel>], iteration_bounds = array<i64: 4>, scalar_prefetch = 1 : i64, scratch_operands = 2 : i64, tpu.core_type = #tpu.core_type<tc>, window_params = [{}, {transform_indices = @transform_1, window_bounds = array<i64: 8, 4, 128>}, {transform_indices = @transform_2, window_bounds = array<i64: 8, 1>}, {transform_indices = @transform_3, window_bounds = array<i64: 8, 8>}, {transform_indices = @transform_4, window_bounds = array<i64: 1, 128>}]} {
    %c8_i32 = arith.constant 8 : i32
    %0 = arith.muli %arg0, %c8_i32 : i32
    %c0_i32 = arith.constant 0 : i32
    %c8_i32_0 = arith.constant 8 : i32
    %1 = arith.addi %c0_i32, %c8_i32_0 : i32
    %c1_i32 = arith.constant 1 : i32
    scf.for %arg9 = %c0_i32 to %1 step %c1_i32  : i32 {
      %c1_i32_22 = arith.constant 1 : i32
      %52 = arith.muli %arg9, %c1_i32_22 : i32
      %c0_i32_23 = arith.constant 0 : i32
      %53 = arith.addi %c0_i32_23, %52 : i32
      %54 = arith.addi %0, %53 : i32
      %c72_i32 = arith.constant 72 : i32
      %55 = arith.muli %53, %c72_i32 : i32
      %c0_i32_24 = arith.constant 0 : i32
      %c72_i32_25 = arith.constant 72 : i32
      %56 = arith.addi %c0_i32_24, %c72_i32_25 : i32
      %c1_i32_26 = arith.constant 1 : i32
      scf.for %arg10 = %c0_i32_24 to %56 step %c1_i32_26  : i32 {
        %c1_i32_28 = arith.constant 1 : i32
        %57 = arith.muli %arg10, %c1_i32_28 : i32
        %c0_i32_29 = arith.constant 0 : i32
        %58 = arith.addi %c0_i32_29, %57 : i32
        %59 = arith.index_cast %54 : i32 to index
        %60 = arith.index_cast %58 : i32 to index
        %61 = memref.load %arg1[%59, %60] : memref<32x72xi32, #tpu.memory_space<smem>>
        %62 = arith.addi %55, %58 : i32
        %c0_i32_30 = arith.constant 0 : i32
        %c0_i32_31 = arith.constant 0 : i32
        %63 = tpu.memref_slice %arg2[%61, %c0_i32_31] : memref<64x128xf32, #tpu.memory_space<any>> -> memref<1x128xf32, #tpu.memory_space<any>>
        %c0_i32_32 = arith.constant 0 : i32
        %64 = tpu.memref_slice %arg7[%62, %c0_i32_32] : memref<576x128xf32, #tpu.memory_space<vmem>> -> memref<1x128xf32, #tpu.memory_space<vmem>>
        %65 = tpu.memref_slice %arg8[%c0_i32_30] : memref<1x!tpu.dma_semaphore, #tpu.memory_space<semaphore_mem>> -> memref<1x!tpu.dma_semaphore, #tpu.memory_space<semaphore_mem>>
        %66 = tpu.memref_squeeze %65 : memref<1x!tpu.dma_semaphore, #tpu.memory_space<semaphore_mem>> -> memref<!tpu.dma_semaphore, #tpu.memory_space<semaphore_mem>>
        tpu.enqueue_dma source(%63 : memref<1x128xf32, #tpu.memory_space<any>>) target(%64 : memref<1x128xf32, #tpu.memory_space<vmem>>) target_semaphore(%66 : memref<!tpu.dma_semaphore, #tpu.memory_space<semaphore_mem>>)
      }
      %c72_i32_27 = arith.constant 72 : i32
    }
    %c8_i32_1 = arith.constant 8 : i32
    %c0 = arith.constant 0 : index
    %c0_2 = arith.constant 0 : index
    %c0_3 = arith.constant 0 : index
    %2 = vector.load %arg3[%c0, %c0_2, %c0_3] : memref<8x4x128xf32, #tpu.memory_space<vmem>>, vector<8x4x128xf32>
    %c0_4 = arith.constant 0 : index
    %c0_5 = arith.constant 0 : index
    %3 = vector.load %arg4[%c0_4, %c0_5] : memref<8x1xi32, #tpu.memory_space<vmem>>, vector<8x1xi32>
    %4 = tpu.iota {dimensions = array<i32: 1>} : vector<8x4xi32>
    %5 = vector.broadcast %3 : vector<8x1xi32> to vector<8x4xi32>
    %6 = arith.cmpi slt, %4, %5 : vector<8x4xi32>
    %7 = arith.extui %6 : vector<8x4xi1> to vector<8x4xi32>
    %8 = arith.sitofp %7 : vector<8x4xi32> to vector<8x4xf32>
    %9 = arith.sitofp %3 : vector<8x1xi32> to vector<8x1xf32>
    %cst = arith.constant 1.000000e+00 : f32
    %10 = vector.broadcast %cst : f32 to vector<8x1xf32>
    %11 = arith.maximumf %9, %10 : vector<8x1xf32>
    %12 = vector.shape_cast %8 : vector<8x4xf32> to vector<8x4x1xf32>
    %13 = vector.broadcast %12 : vector<8x4x1xf32> to vector<8x4x128xf32>
    %14 = arith.mulf %2, %13 : vector<8x4x128xf32>
    %cst_6 = arith.constant dense<0.000000e+00> : vector<8x128xf32>
    %15 = vector.multi_reduction <add>, %14, %cst_6 [1] : vector<8x4x128xf32> to vector<8x128xf32>
    %16 = vector.broadcast %11 : vector<8x1xf32> to vector<8x128xf32>
    %17 = arith.divf %15, %16 : vector<8x128xf32>
    %c0_i32_7 = arith.constant 0 : i32
    %c576_i32 = arith.constant 576 : i32
    %18 = arith.addi %c0_i32_7, %c576_i32 : i32
    %c1_i32_8 = arith.constant 1 : i32
    scf.for %arg9 = %c0_i32_7 to %18 step %c1_i32_8  : i32 {
      %c0_i32_22 = arith.constant 0 : i32
      %c0_i32_23 = arith.constant 0 : i32
      %c0_i32_24 = arith.constant 0 : i32
      %52 = tpu.memref_slice %arg2[%c0_i32_23, %c0_i32_24] : memref<64x128xf32, #tpu.memory_space<any>> -> memref<1x128xf32, #tpu.memory_space<any>>
      %c0_i32_25 = arith.constant 0 : i32
      %c0_i32_26 = arith.constant 0 : i32
      %53 = tpu.memref_slice %arg7[%c0_i32_25, %c0_i32_26] : memref<576x128xf32, #tpu.memory_space<vmem>> -> memref<1x128xf32, #tpu.memory_space<vmem>>
      %54 = tpu.memref_slice %arg8[%c0_i32_22] : memref<1x!tpu.dma_semaphore, #tpu.memory_space<semaphore_mem>> -> memref<1x!tpu.dma_semaphore, #tpu.memory_space<semaphore_mem>>
      %55 = tpu.memref_squeeze %54 : memref<1x!tpu.dma_semaphore, #tpu.memory_space<semaphore_mem>> -> memref<!tpu.dma_semaphore, #tpu.memory_space<semaphore_mem>>
      tpu.wait_dma2 semaphore(%55 : memref<!tpu.dma_semaphore, #tpu.memory_space<semaphore_mem>>) src(%52 : memref<1x128xf32, #tpu.memory_space<any>>) dst(%53 : memref<1x128xf32, #tpu.memory_space<vmem>>)
    }
    %c0_9 = arith.constant 0 : index
    %c0_10 = arith.constant 0 : index
    %19 = vector.load %arg7[%c0_9, %c0_10] : memref<576x128xf32, #tpu.memory_space<vmem>>, vector<576x128xf32>
    %20 = vector.shape_cast %19 : vector<576x128xf32> to vector<8x72x128xf32>
    %21 = vector.shape_cast %17 : vector<8x128xf32> to vector<8x1x128xf32>
    %22 = vector.broadcast %21 : vector<8x1x128xf32> to vector<8x72x128xf32>
    %23 = arith.mulf %20, %22 : vector<8x72x128xf32>
    %cst_11 = arith.constant dense<0.000000e+00> : vector<8x72xf32>
    %24 = vector.multi_reduction <add>, %23, %cst_11 [2] : vector<8x72x128xf32> to vector<8x72xf32>
    %25 = tpu.iota {dimensions = array<i32: 1>} : vector<8x72xi32>
    %c8_i32_12 = arith.constant 8 : i32
    %26 = vector.broadcast %c8_i32_12 : i32 to vector<8x72xi32>
    %27 = arith.cmpi slt, %25, %26 : vector<8x72xi32>
    %cst_13 = arith.constant 0.000000e+00 : f32
    %28 = vector.broadcast %cst_13 : f32 to vector<8x72xf32>
    %29 = arith.subf %28, %24 : vector<8x72xf32>
    %30 = arith.select %27, %29, %24 : vector<8x72xi1>, vector<8x72xf32>
    %cst_14 = arith.constant 0.000000e+00 : f32
    %31 = vector.broadcast %cst_14 : f32 to vector<8x72xf32>
    %32 = arith.maximumf %30, %31 : vector<8x72xf32>
    %33 = math.absf %30 : vector<8x72xf32>
    %cst_15 = arith.constant 0.000000e+00 : f32
    %34 = vector.broadcast %cst_15 : f32 to vector<8x72xf32>
    %35 = arith.subf %34, %33 : vector<8x72xf32>
    %36 = math.exp %35 : vector<8x72xf32>
    %37 = math.log1p %36 : vector<8x72xf32>
    %38 = arith.addf %32, %37 : vector<8x72xf32>
    %c0_16 = arith.constant 0 : index
    %c0_17 = arith.constant 0 : index
    %39 = vector.load %arg5[%c0_16, %c0_17] : memref<8x8xi32, #tpu.memory_space<vmem>>, vector<8x8xi32>
    %c0_i32_18 = arith.constant 0 : i32
    %40 = vector.broadcast %c0_i32_18 : i32 to vector<8x8xi32>
    %41 = arith.cmpi ne, %39, %40 : vector<8x8xi32>
    %42 = arith.extui %41 : vector<8x8xi1> to vector<8x8xi32>
    %43 = arith.sitofp %42 : vector<8x8xi32> to vector<8x8xf32>
    %44 = tpu.concatenate %43, %43, %43, %43, %43, %43, %43, %43, %43 in 1 : vector<8x8xf32>, vector<8x8xf32>, vector<8x8xf32>, vector<8x8xf32>, vector<8x8xf32>, vector<8x8xf32>, vector<8x8xf32>, vector<8x8xf32>, vector<8x8xf32> -> vector<8x72xf32>
    %45 = arith.mulf %38, %44 : vector<8x72xf32>
    %46 = vector.shape_cast %45 : vector<8x72xf32> to vector<1x8x72xf32>
    %cst_19 = arith.constant dense<0.000000e+00> : vector<1xf32>
    %47 = vector.multi_reduction <add>, %46, %cst_19 [1, 2] : vector<1x8x72xf32> to vector<1xf32>
    %48 = vector.shape_cast %47 : vector<1xf32> to vector<1x1x1xf32>
    %49 = vector.extract %48[0, 0, 0] : f32 from vector<1x1x1xf32>
    %50 = vector.broadcast %49 : f32 to vector<1x128xf32>
    %c0_20 = arith.constant 0 : index
    %c0_21 = arith.constant 0 : index
    %51 = vector.load %arg6[%c0_20, %c0_21] : memref<1x128xf32, #tpu.memory_space<vmem>>, vector<1x128xf32>
    tpu.vector_store %arg6[%c0_20, %c0_21], %50 {strides = array<i32>} : memref<1x128xf32, #tpu.memory_space<vmem>>, vector<1x128xf32>,
    return
  }
  func.func @transform_1(%arg0: i32, %arg1: memref<32x72xi32, #tpu.memory_space<smem>>) -> (i32, i32, i32) {
    %c0_i32 = arith.constant 0 : i32
    %c0_i32_0 = arith.constant 0 : i32
    %c0_i32_1 = arith.constant 0 : i32
    return %arg0, %c0_i32, %c0_i32_0 : i32, i32, i32
  }
  func.func @transform_2(%arg0: i32, %arg1: memref<32x72xi32, #tpu.memory_space<smem>>) -> (i32, i32) {
    %c0_i32 = arith.constant 0 : i32
    %c0_i32_0 = arith.constant 0 : i32
    return %arg0, %c0_i32 : i32, i32
  }
  func.func @transform_3(%arg0: i32, %arg1: memref<32x72xi32, #tpu.memory_space<smem>>) -> (i32, i32) {
    %c0_i32 = arith.constant 0 : i32
    %c0_i32_0 = arith.constant 0 : i32
    return %arg0, %c0_i32 : i32, i32
  }
  func.func @transform_4(%arg0: i32, %arg1: memref<32x72xi32, #tpu.memory_space<smem>>) -> (i32, i32) {
    %c0_i32 = arith.constant 0 : i32
    %c0_i32_0 = arith.constant 0 : i32
    return %c0_i32, %arg0 : i32, i32
  }
}

</mosaic_0001>

<llo_original>
// kernel: tpu_custom_call.1
$region0: #{tpu_custom_call.1}
  #allocation0 [shape = 'u32[]', space=smem, size = 0x4, offset = 0x4, fixed_abs, tag = 'smem constant byte address 0x4 - core index']
  #allocation1 [shape = 'u32[144,128]{1,0:T(1,128)}', space=vmem, size = 0x12000, scoped, tag = 'internal scratch']
  #allocation2 [shape = 'f32[576,128]{1,0:T(8,128)}', space=vmem, size = 0x48000, scoped, tag = 'scratch operand']
  #allocation3 [shape = 's32[1]{0}', space=sflag, size = 0x4, scoped, tag = 'scratch operand']
  #allocation4 [shape = 's32[1]{0}', space=sflag, size = 0x4, scoped, tag = 'scoped memory for tpu_custom_call.1']
  #allocation5 [shape = 'u8[16384]{0}', space=smem, size = 0x4000, scoped, tag = 'prefetched SMEM operand 0']
  #allocation10 [shape = 's32[]', space=sflag, size = 0x4, offset = 0, fixed_abs, tag = 'sflag constant byte address 0x0 - dummy sync flag']
  %s0 = inlined_call_operand.hbm [shape: s32[32,72], index: 0, kind: input, shape index: {}]
  %s1 = inlined_call_operand.vmem [shape: f32[64,128], index: 1, kind: input, shape index: {}]
  %s2 = inlined_call_operand.hbm [shape: f32[32,4,128], index: 2, kind: input, shape index: {}]
  %s3 = inlined_call_operand.vmem [shape: s32[32,1], index: 3, kind: input, shape index: {}]
  %s4 = inlined_call_operand.vmem [shape: s32[32,8], index: 4, kind: input, shape index: {}]
  %s5 = inlined_call_operand.hbm [shape: f32[1,512], index: 5, kind: output, shape index: {}]
  %s6 = sld [smem:[#allocation0]]
  $region100: #{tpu_custom_call.1} parent=0
    _
  %s8 = ssub.s32 1, %s6
  %s9 = scalar_select 0, %s8, %s6
  %11 = dma.hbm_to_smem %s0, 512, [#allocation5], [#allocation4]
  %12 = dma.done [#allocation4], 512
  %13 = sfence
  $region1: #{tpu_custom_call.1} parent=0
    #allocation6 [shape = 'u8[32768]{0}', space=vmem, size = 0x8000, scoped, tag = 'input window, operand 2']
    #allocation7 [shape = 's32[2]{0}', space=sflag, size = 0x8, scoped, tag = 'scoped memory for tpu_custom_call.1']
    #allocation8 [shape = 's32[2]{0}', space=sflag, size = 0x8, scoped, tag = 'scoped memory for tpu_custom_call.1']
    #allocation9 [shape = 'u8[1024]{0}', space=vmem, size = 0x400, scoped, tag = 'output window, operand 0']
    %14 = vsyncpa [#allocation7], 0
    %s15 = scalar_lea.sflag [#allocation7], 1
    %16 = vsyncpa %s15, 0
    %17 = vsyncpa [#allocation8], 0
    %s18 = scalar_lea.sflag [#allocation8], 1
    %19 = vsyncpa %s18, 0
    loop: start=0, step=1, limit=6
    $region2: #{tpu_custom_call.1} parent=1 // loop_pre_header
      _
    $region3: #{tpu_custom_call.1} parent=1 // loop_header
      %s21 = sphi 0, %s25
      %p22 = scmp.ge.s32.totalorder %s21, 6
      %s31 = sphi 0, %s33
      %s34 = sphi 0, %s31
      %s35 = sphi 0, %s34
      %s51 = sphi 0, %s35
      %s57 = sphi 0, %s59
      %s60 = sphi 0, %s57
      %s61 = sphi 0, %s60
      %s77 = sphi 0, %s61
      %s83 = sphi 0, %s85
      %s86 = sphi 0, %s83
      %s87 = sphi 0, %s86
      %s103 = sphi 0, %s87
      %s109 = sphi 0, %s111
      %s112 = sphi 0, %s109
      %s113 = sphi 0, %s112
      %s129 = sphi 0, %s113
    $region4: #{tpu_custom_call.1} parent=1 // loop_header_branch
      %24 = sbr.rel (%p22) target = $region8
    $region5: #{tpu_custom_call.1} parent=1 // loop_body
      %s26 = ssub.s32 %s21, 1
      %s27 = ssub.s32 %s21, 2
      %s28 = sadd.s32 %s21, 1
      %s29 = ssub.s32 %s21, %s28
      %p30 = scmp.eq.s32.totalorder %s29, 0
      %s32 = sadd.s32 %s31, 1
      %s33 = scalar_select %p30, %s31, %s32
      %p36 = pneg %p30
      %p37 = scmp.eq.s32.totalorder %s21, 3
      %p38 = por %p36, %p37
      %p39 = scmp.ne.s32.totalorder %s31, %s34
      %p40 = scmp.eq.s32.totalorder %s21, 0
      %p41 = por %p39, %p40
      %p42 = scmp.ne.s32.totalorder %s31, %s34
      %p43 = scmp.eq.s32.totalorder %s26, 3
      %p44 = por %p42, %p43
      %p45 = scmp.ne.s32.totalorder %s34, %s35
      %p46 = scmp.eq.s32.totalorder %s26, 0
      %p47 = por %p45, %p46
      %p48 = scmp.ne.s32.totalorder %s34, %s35
      %p49 = scmp.eq.s32.totalorder %s27, 3
      %p50 = por %p48, %p49
      %p52 = scmp.ne.s32.totalorder %s35, %s51
      %p53 = scmp.eq.s32.totalorder %s27, 0
      %p54 = por %p52, %p53
      %s55 = ssub.s32 %s21, %s28
      %p56 = scmp.eq.s32.totalorder %s55, 0
      %s58 = sadd.s32 %s57, 1
      %s59 = scalar_select %p56, %s57, %s58
      %p62 = pneg %p56
      %p63 = scmp.eq.s32.totalorder %s21, 3
      %p64 = por %p62, %p63
      %p65 = scmp.ne.s32.totalorder %s57, %s60
      %p66 = scmp.eq.s32.totalorder %s21, 0
      %p67 = por %p65, %p66
      %p68 = scmp.ne.s32.totalorder %s57, %s60
      %p69 = scmp.eq.s32.totalorder %s26, 3
      %p70 = por %p68, %p69
      %p71 = scmp.ne.s32.totalorder %s60, %s61
      %p72 = scmp.eq.s32.totalorder %s26, 0
      %p73 = por %p71, %p72
      %p74 = scmp.ne.s32.totalorder %s60, %s61
      %p75 = scmp.eq.s32.totalorder %s27, 3
      %p76 = por %p74, %p75
      %p78 = scmp.ne.s32.totalorder %s61, %s77
      %p79 = scmp.eq.s32.totalorder %s27, 0
      %p80 = por %p78, %p79
      %s81 = ssub.s32 %s21, %s28
      %p82 = scmp.eq.s32.totalorder %s81, 0
      %s84 = sadd.s32 %s83, 1
      %s85 = scalar_select %p82, %s83, %s84
      %p88 = pneg %p82
      %p89 = scmp.eq.s32.totalorder %s21, 3
      %p90 = por %p88, %p89
      %p91 = scmp.ne.s32.totalorder %s83, %s86
      %p92 = scmp.eq.s32.totalorder %s21, 0
      %p93 = por %p91, %p92
      %p94 = scmp.ne.s32.totalorder %s83, %s86
      %p95 = scmp.eq.s32.totalorder %s26, 3
      %p96 = por %p94, %p95
      %p97 = scmp.ne.s32.totalorder %s86, %s87
      %p98 = scmp.eq.s32.totalorder %s26, 0
      %p99 = por %p97, %p98
      %p100 = scmp.ne.s32.totalorder %s86, %s87
      %p101 = scmp.eq.s32.totalorder %s27, 3
      %p102 = por %p100, %p101
      %p104 = scmp.ne.s32.totalorder %s87, %s103
      %p105 = scmp.eq.s32.totalorder %s27, 0
      %p106 = por %p104, %p105
      %s107 = ssub.s32 %s21, %s28
      %p108 = scmp.eq.s32.totalorder %s107, 0
      %s110 = sadd.s32 %s109, 1
      %s111 = scalar_select %p108, %s109, %s110
      %p114 = pneg %p108
      %p115 = scmp.eq.s32.totalorder %s21, 3
      %p116 = por %p114, %p115
      %p117 = scmp.ne.s32.totalorder %s109, %s112
      %p118 = scmp.eq.s32.totalorder %s21, 0
      %p119 = por %p117, %p118
      %p120 = scmp.ne.s32.totalorder %s109, %s112
      %p121 = scmp.eq.s32.totalorder %s26, 3
      %p122 = por %p120, %p121
      %p123 = scmp.ne.s32.totalorder %s112, %s113
      %p124 = scmp.eq.s32.totalorder %s26, 0
      %p125 = por %p123, %p124
      %p126 = scmp.ne.s32.totalorder %s112, %s113
      %p127 = scmp.eq.s32.totalorder %s27, 3
      %p128 = por %p126, %p127
      %p130 = scmp.ne.s32.totalorder %s113, %s129
      %p131 = scmp.eq.s32.totalorder %s27, 0
      %p132 = por %p130, %p131
      %p133 = scmp.le.s32.totalorder 1, %s21
      %p134 = scmp.lt.s32.totalorder %s21, 5
      %p135 = pnand %p133, %p134
      %p136 = pneg %p135
      // Predicated region
      $region9: #{tpu_custom_call.1} parent=5 // pred_check
        _
      $region10: #{tpu_custom_call.1} parent=5 // pred_check_branch
        %138 = sbr.rel (%p135) target = $region12
      $region11: #{tpu_custom_call.1} parent=5 // pred_region
        %s139 = ssub.s32 %s21, 1
      $region12: #{tpu_custom_call.1} parent=5 // pred_fallthru
        _
      %p140 = scmp.lt.s32.totalorder %s21, 4
      // Predicated region
      $region13: #{tpu_custom_call.1} parent=5 // pred_check
        %p141 = pneg %p140
      $region14: #{tpu_custom_call.1} parent=5 // pred_check_branch
        %143 = sbr.rel (%p141) target = $region16
      $region15: #{tpu_custom_call.1} parent=5 // pred_region
        // Predicated region
        $region17: #{tpu_custom_call.1} parent=15 // pred_check
          %p144 = pneg %p41
        $region18: #{tpu_custom_call.1} parent=15 // pred_check_branch
          %146 = sbr.rel (%p144) target = $region20
        $region19: #{tpu_custom_call.1} parent=15 // pred_region
          %s147 = sand.u32 %s31, 1
          %s148 = scalar_lea.sflag [#allocation7], %s147
          %s149 = sand.u32 %s31, 1
          %s150 = smul.addr %s149, 32
          %s151 = scalar_lea.vmem [#allocation6], %s150
          %s152 = smul.u32 8, %s21
          %s154 = ssub.s32 512, 512
          %155 = vsyncadd %s148, %s154
          %s156 = smul.addr %s152, 64
          %s157 = scalar_lea.hbm %s2, %s156
          %s158 = sshll.u32 %s151, 4
          %s159 = int_to_ptr.vmem [resolvable:$true] %s158
          %164 = dma.hbm_to_vmem [thread:$0]  %s157, 512, %s159, %s148, 64, 64, 4
        $region20: #{tpu_custom_call.1} parent=15 // pred_fallthru
          _
        // Predicated region
        $region21: #{tpu_custom_call.1} parent=15 // pred_check
          %p165 = pneg %p67
        $region22: #{tpu_custom_call.1} parent=15 // pred_check_branch
          %167 = sbr.rel (%p165) target = $region24
        $region23: #{tpu_custom_call.1} parent=15 // pred_region
          %p168 = scmp.lt.s32.totalorder %s21, 3
          %s169 = scalar_select %p168, %s21, 3
          %s170 = smul.addr %s169, 8
          %s171 = scalar_lea.vmem %s3, %s170
        $region24: #{tpu_custom_call.1} parent=15 // pred_fallthru
          _
        // Predicated region
        $region25: #{tpu_custom_call.1} parent=15 // pred_check
          %p172 = pneg %p93
        $region26: #{tpu_custom_call.1} parent=15 // pred_check_branch
          %174 = sbr.rel (%p172) target = $region28
        $region27: #{tpu_custom_call.1} parent=15 // pred_region
          %p175 = scmp.lt.s32.totalorder %s21, 3
          %s176 = scalar_select %p175, %s21, 3
          %s177 = smul.addr %s176, 8
          %s178 = scalar_lea.vmem %s4, %s177
        $region28: #{tpu_custom_call.1} parent=15 // pred_fallthru
          _
      $region16: #{tpu_custom_call.1} parent=5 // pred_fallthru
        _
      %p179 = scmp.le.s32.totalorder 1, %s21
      %p180 = scmp.lt.s32.totalorder %s21, 5
      %p181 = pnand %p179, %p180
      %p182 = pneg %p181
      // Predicated region
      $region29: #{tpu_custom_call.1} parent=5 // pred_check
        _
      $region30: #{tpu_custom_call.1} parent=5 // pred_check_branch
        %184 = sbr.rel (%p181) target = $region32
      $region31: #{tpu_custom_call.1} parent=5 // pred_region
        %s185 = ssub.s32 %s21, 1
        %s186 = sand.u32 %s34, 1
        %s187 = scalar_lea.sflag [#allocation7], %s186
        %s188 = sand.u32 %s34, 1
        %s189 = smul.addr %s188, 32
        %s190 = scalar_lea.vmem [#allocation6], %s189
        // Predicated region
        $region33: #{tpu_custom_call.1} parent=31 // pred_check
          %p191 = pneg %p47
        $region34: #{tpu_custom_call.1} parent=31 // pred_check_branch
          %193 = sbr.rel (%p191) target = $region36
        $region35: #{tpu_custom_call.1} parent=31 // pred_region
          %194 = dma.done %s187, 512
        $region36: #{tpu_custom_call.1} parent=31 // pred_fallthru
          _
        %s195 = sand.u32 %s34, 1
        %s196 = scalar_lea.sflag [#allocation7], %s195
        %s197 = sand.u32 %s34, 1
        %s198 = smul.addr %s197, 32
        %s199 = scalar_lea.vmem [#allocation6], %s198
        %p200 = pneg %p47
        %p201 = pneg %p44
        %p202 = scmp.lt.s32.totalorder %s26, 3
        %s203 = scalar_select %p202, %s26, 3
        %s204 = smul.addr %s203, 8
        %s205 = scalar_lea.vmem %s3, %s204
        %p206 = pneg %p73
        %p207 = pneg %p70
        %p208 = scmp.lt.s32.totalorder %s26, 3
        %s209 = scalar_select %p208, %s26, 3
        %s210 = smul.addr %s209, 8
        %s211 = scalar_lea.vmem %s4, %s210
        %p212 = pneg %p99
        %p213 = pneg %p96
        %p214 = pneg %p125
        %p215 = pneg %p122
        %s216 = sand.u32 %s112, 1
        %s217 = scalar_lea.sflag [#allocation8], %s216
        %s218 = sand.u32 %s112, 1
        %s219 = scalar_lea.vmem [#allocation9], %s218
        %s220 = smul.u32 8, %s26
        %p221 = scmp.lt.s32.totalorder %s26, 3
        %s222 = scalar_select %p221, %s26, 3
        %s223 = smul.addr %s222, 8
        %s224 = scalar_lea.vmem %s3, %s223
        %p225 = scmp.lt.s32.totalorder %s26, 3
        %s226 = scalar_select %p225, %s26, 3
        %s227 = smul.addr %s226, 8
        %s228 = scalar_lea.vmem %s4, %s227
        %s229 = smul.u32 %s26, 8
        loop: start=0, step=1, limit=8
        $region37: #{tpu_custom_call.1} parent=31 // loop_pre_header
          _
        $region38: #{tpu_custom_call.1} parent=31 // loop_header
          %s231 = sphi 0, %s235
          %p232 = scmp.ge.s32.totalorder %s231, 8
        $region39: #{tpu_custom_call.1} parent=31 // loop_header_branch
          %234 = sbr.rel (%p232) target = $region43
        $region40: #{tpu_custom_call.1} parent=31 // loop_body
          %s236 = sadd.s32 %s229, %s231
          %s237 = smul.u32 %s231, 72
          loop: start=0, step=1, limit=72
          $region44: #{tpu_custom_call.1} parent=40 // loop_pre_header
            _
          $region45: #{tpu_custom_call.1} parent=40 // loop_header
            %s239 = sphi 0, %s243
            %p240 = scmp.ge.s32.totalorder %s239, 72
          $region46: #{tpu_custom_call.1} parent=40 // loop_header_branch
            %242 = sbr.rel (%p240) target = $region50
          $region47: #{tpu_custom_call.1} parent=40 // loop_body
            %s244 = sshra.s32 %s239, 7
            %s245 = sand.u32 %s239, 127
            %s246 = sadd.s32 %s244, %s236
            %s247 = smul.u32 %s246, 128
            %s248 = sshra.s32 %s239, 7
            %s249 = sand.u32 %s239, 127
            %s250 = sadd.s32 %s247, %s249
            %s251 = sld [smem:[#allocation5 + %s250]]
            %s252 = sadd.s32 %s237, %s239
            %s253 = scalar_lea.vmem %s1, %s251
            %s254 = scalar_lea.vmem [#allocation2], %s252
            %p256 = scmp.lt.u32.totalorder 1, 8
            %p257 = pneg %p256
            // Predicated region
            $region51: #{tpu_custom_call.1} parent=47 // pred_check
              _
            $region52: #{tpu_custom_call.1} parent=47 // pred_check_branch
              %259 = sbr.rel (%p256) target = $region54
            $region53: #{tpu_custom_call.1} parent=47 // pred_region
              %s274 = sand.u32 1, 7
              %p275 = scmp.eq.s32.totalorder %s274, 0
              %p276 = pneg %p275
              // Predicated region
              $region66: #{tpu_custom_call.1} parent=53 // pred_check
                _
              $region67: #{tpu_custom_call.1} parent=53 // pred_check_branch
                %278 = sbr.rel (%p275) target = $region69
              $region68: #{tpu_custom_call.1} parent=53 // pred_region
                %s279 = sand.u32 1, 7
                %s280 = ssub.s32 1, %s279
                %s281 = scalar_lea.vmem %s253, %s280
                %s282 = ssub.s32 1, %s279
                %s283 = scalar_lea.vmem %s254, %s282 [#allocation2]
                %s284 = sshllo.u32 0, %s279
                loop: start=0, step=1, limit=1
                $region70: #{tpu_custom_call.1} parent=68 // loop_pre_header
                  _
                $region71: #{tpu_custom_call.1} parent=68 // loop_header
                  %s286 = sphi 0, %s290
                  %p287 = scmp.ge.s32.totalorder %s286, 1
                  %s291 = sphi %s281, %s281
                  %s292 = sphi %s283, %s283
                $region72: #{tpu_custom_call.1} parent=68 // loop_header_branch
                  %289 = sbr.rel (%p287) target = $region76
                $region73: #{tpu_custom_call.1} parent=68 // loop_body
                  %v293 = vld [vmem:[%s291] sm:%s284]
                  %294 = vst [vmem:[%s292] sm:%s284] %v293
                $region74: #{tpu_custom_call.1} parent=68 // loop_footer
                  %s290 = sadd.s32 1, %s286
                $region75: #{tpu_custom_call.1} parent=68 // loop_footer_branch
                  %285 = sbr.rel target = $region71
                $region76: #{tpu_custom_call.1} parent=68 // loop_exit
                  _
              $region69: #{tpu_custom_call.1} parent=53 // pred_fallthru
                _
            $region54: #{tpu_custom_call.1} parent=47 // pred_fallthru
              _
            // Predicated region
            $region55: #{tpu_custom_call.1} parent=47 // pred_check
              %p260 = pneg %p256
            $region56: #{tpu_custom_call.1} parent=47 // pred_check_branch
              %262 = sbr.rel (%p260) target = $region58
            $region57: #{tpu_custom_call.1} parent=47 // pred_region
              %s263 = sshllo.u32 0, 1
              loop: start=0, step=1, limit=1
              $region59: #{tpu_custom_call.1} parent=57 // loop_pre_header
                _
              $region60: #{tpu_custom_call.1} parent=57 // loop_header
                %s265 = sphi 0, %s269
                %p266 = scmp.ge.s32.totalorder %s265, 1
                %s270 = sphi %s253, %s253
                %s271 = sphi %s254, %s254
              $region61: #{tpu_custom_call.1} parent=57 // loop_header_branch
                %268 = sbr.rel (%p266) target = $region65
              $region62: #{tpu_custom_call.1} parent=57 // loop_body
                %v272 = vld [vmem:[%s270] sm:%s263]
                %273 = vst [vmem:[%s271] sm:%s263] %v272
              $region63: #{tpu_custom_call.1} parent=57 // loop_footer
                %s269 = sadd.s32 1, %s265
              $region64: #{tpu_custom_call.1} parent=57 // loop_footer_branch
                %264 = sbr.rel target = $region60
              $region65: #{tpu_custom_call.1} parent=57 // loop_exit
                _
            $region58: #{tpu_custom_call.1} parent=47 // pred_fallthru
              _
            // Predicated region
            $region77: #{tpu_custom_call.1} parent=47 // pred_check
              _
            $region78: #{tpu_custom_call.1} parent=47 // pred_check_branch
              %297 = sbr.rel (0) target = $region80
            $region79: #{tpu_custom_call.1} parent=47 // pred_region
              %298 = vsyncadd [#allocation3], 16
            $region80: #{tpu_custom_call.1} parent=47 // pred_fallthru
              _
          $region48: #{tpu_custom_call.1} parent=40 // loop_footer
            %s243 = sadd.s32 1, %s239
          $region49: #{tpu_custom_call.1} parent=40 // loop_footer_branch
            %238 = sbr.rel target = $region45
          $region50: #{tpu_custom_call.1} parent=40 // loop_exit
            _
        $region41: #{tpu_custom_call.1} parent=31 // loop_footer
          %s235 = sadd.s32 1, %s231
        $region42: #{tpu_custom_call.1} parent=31 // loop_footer_branch
          %230 = sbr.rel target = $region38
        $region43: #{tpu_custom_call.1} parent=31 // loop_exit
          _
        %v299 = vld [vmem:[%s190] sm:$0xf]
        %v300 = vld [vmem:[%s190 + $0x4] sm:$0xf]
        %v301 = vld [vmem:[%s190 + $0x8] sm:$0xf]
        %v302 = vld [vmem:[%s190 + $0xc] sm:$0xf]
        %v303 = vld [vmem:[%s190 + $0x10] sm:$0xf]
        %v304 = vld [vmem:[%s190 + $0x14] sm:$0xf]
        %v305 = vld [vmem:[%s190 + $0x18] sm:$0xf]
        %v306 = vld [vmem:[%s190 + $0x1c] sm:$0xf]
        %v307 = vld [vmem:[%s224] sm:$0xff]
        %v308 = vlaneseq
        %v309 = vand.u32 %v308, 127
        %310 = vset.pattern.permute.xlu0 0
        %311 = vperm.xlu0 %310, %v307
        %v312 = vpop.permute.xlu0 %311
        %vm313 = vcmp.lt.s32.totalorder %v309, %v312
        %v314 = vsel %vm313, 1, 0
        %v315 = vcvt.s32.f32 %v314
        %v316 = vcvt.s32.f32 %v307
        %v317 = vmax.f32 %v316, 1.0
        %v318 = vlaneseq
        %v319 = vshrl.u32 %v318, 7
        %v320 = vsub.s32 0, %v319
        %v321 = vrot.slane %v315, %v320
        %323 = vbcast.lane.b32.xlu0 %v321, 256
        %v324 = vpop.permute.xlu0 %323
        %v325 = vlaneseq
        %v326 = vshrl.u32 %v325, 7
        %v327 = vsub.s32 1, %v326
        %v328 = vrot.slane %v315, %v327
        %330 = vbcast.lane.b32.xlu0 %v328, 256
        %v331 = vpop.permute.xlu0 %330
        %v332 = vlaneseq
        %v333 = vshrl.u32 %v332, 7
        %v334 = vsub.s32 2, %v333
        %v335 = vrot.slane %v315, %v334
        %337 = vbcast.lane.b32.xlu0 %v335, 256
        %v338 = vpop.permute.xlu0 %337
        %v339 = vlaneseq
        %v340 = vshrl.u32 %v339, 7
        %v341 = vsub.s32 3, %v340
        %v342 = vrot.slane %v315, %v341
        %344 = vbcast.lane.b32.xlu0 %v342, 256
        %v345 = vpop.permute.xlu0 %344
        %v346 = vlaneseq
        %v347 = vshrl.u32 %v346, 7
        %v348 = vsub.s32 4, %v347
        %v349 = vrot.slane %v315, %v348
        %351 = vbcast.lane.b32.xlu0 %v349, 256
        %v352 = vpop.permute.xlu0 %351
        %v353 = vlaneseq
        %v354 = vshrl.u32 %v353, 7
        %v355 = vsub.s32 5, %v354
        %v356 = vrot.slane %v315, %v355
        %358 = vbcast.lane.b32.xlu0 %v356, 256
        %v359 = vpop.permute.xlu0 %358
        %v360 = vlaneseq
        %v361 = vshrl.u32 %v360, 7
        %v362 = vsub.s32 6, %v361
        %v363 = vrot.slane %v315, %v362
        %365 = vbcast.lane.b32.xlu0 %v363, 256
        %v366 = vpop.permute.xlu0 %365
        %v367 = vlaneseq
        %v368 = vshrl.u32 %v367, 7
        %v369 = vsub.s32 7, %v368
        %v370 = vrot.slane %v315, %v369
        %372 = vbcast.lane.b32.xlu0 %v370, 256
        %v373 = vpop.permute.xlu0 %372
        %v374 = vmul.f32 %v299, %v324
        %v375 = vmul.f32 %v300, %v331
        %v376 = vmul.f32 %v301, %v338
        %v377 = vmul.f32 %v302, %v345
        %v378 = vmul.f32 %v303, %v352
        %v379 = vmul.f32 %v304, %v359
        %v380 = vmul.f32 %v305, %v366
        %v381 = vmul.f32 %v306, %v373
        %vm382 = vcmask 1043456
        %v383 = vsel %vm382, %v374, 0.0
        %v384 = vrot.slane %v383, 4
        %v385 = vadd.f32 %v383, %v384
        %v386 = vrot.slane %v385, 2
        %v387 = vadd.f32 %v385, %v386
        %v388 = vrot.slane %v387, 1
        %v389 = vadd.f32 %v387, %v388
        %v390 = vsel %vm382, %v375, 0.0
        %v391 = vrot.slane %v390, 4
        %v392 = vadd.f32 %v390, %v391
        %v393 = vrot.slane %v392, 2
        %v394 = vadd.f32 %v392, %v393
        %v395 = vrot.slane %v394, 1
        %v396 = vadd.f32 %v394, %v395
        %v397 = vsel %vm382, %v376, 0.0
        %v398 = vrot.slane %v397, 4
        %v399 = vadd.f32 %v397, %v398
        %v400 = vrot.slane %v399, 2
        %v401 = vadd.f32 %v399, %v400
        %v402 = vrot.slane %v401, 1
        %v403 = vadd.f32 %v401, %v402
        %v404 = vsel %vm382, %v377, 0.0
        %v405 = vrot.slane %v404, 4
        %v406 = vadd.f32 %v404, %v405
        %v407 = vrot.slane %v406, 2
        %v408 = vadd.f32 %v406, %v407
        %v409 = vrot.slane %v408, 1
        %v410 = vadd.f32 %v408, %v409
        %v411 = vsel %vm382, %v378, 0.0
        %v412 = vrot.slane %v411, 4
        %v413 = vadd.f32 %v411, %v412
        %v414 = vrot.slane %v413, 2
        %v415 = vadd.f32 %v413, %v414
        %v416 = vrot.slane %v415, 1
        %v417 = vadd.f32 %v415, %v416
        %v418 = vsel %vm382, %v379, 0.0
        %v419 = vrot.slane %v418, 4
        %v420 = vadd.f32 %v418, %v419
        %v421 = vrot.slane %v420, 2
        %v422 = vadd.f32 %v420, %v421
        %v423 = vrot.slane %v422, 1
        %v424 = vadd.f32 %v422, %v423
        %v425 = vsel %vm382, %v380, 0.0
        %v426 = vrot.slane %v425, 4
        %v427 = vadd.f32 %v425, %v426
        %v428 = vrot.slane %v427, 2
        %v429 = vadd.f32 %v427, %v428
        %v430 = vrot.slane %v429, 1
        %v431 = vadd.f32 %v429, %v430
        %v432 = vsel %vm382, %v381, 0.0
        %v433 = vrot.slane %v432, 4
        %v434 = vadd.f32 %v432, %v433
        %v435 = vrot.slane %v434, 2
        %v436 = vadd.f32 %v434, %v435
        %v437 = vrot.slane %v436, 1
        %v438 = vadd.f32 %v436, %v437
        %440 = vset.pattern.permute.xlu0 0
        %441 = vperm.xlu0 %440, %v317
        %v442 = vpop.permute.xlu0 %441
        %v443 = vrot.slane %v442, 1
        %v444 = vrot.slane %v442, 2
        %v445 = vrot.slane %v442, 3
        %v446 = vrot.slane %v442, 4
        %v447 = vrot.slane %v442, 5
        %v448 = vrot.slane %v442, 6
        %v449 = vrot.slane %v442, 7
        %v458 = vrcp.pop %v442
        %v459 = vmul.f32 %v389, %v458
        %v460 = vrcp.pop %v443
        %v461 = vmul.f32 %v396, %v460
        %v462 = vrcp.pop %v444
        %v463 = vmul.f32 %v403, %v462
        %v464 = vrcp.pop %v445
        %v465 = vmul.f32 %v410, %v464
        %v466 = vrcp.pop %v446
        %v467 = vmul.f32 %v417, %v466
        %v468 = vrcp.pop %v447
        %v469 = vmul.f32 %v424, %v468
        %v470 = vrcp.pop %v448
        %v471 = vmul.f32 %v431, %v470
        %v472 = vrcp.pop %v449
        %v473 = vmul.f32 %v438, %v472
        loop: start=0, step=1, limit=576
        $region81: #{tpu_custom_call.1} parent=31 // loop_pre_header
          _
        $region82: #{tpu_custom_call.1} parent=31 // loop_header
          %s475 = sphi 0, %s479
          %p476 = scmp.ge.s32.totalorder %s475, 576
        $region83: #{tpu_custom_call.1} parent=31 // loop_header_branch
          %478 = sbr.rel (%p476) target = $region87
        $region84: #{tpu_custom_call.1} parent=31 // loop_body
          %s480 = smul.u32 1, 1
          %s481 = sshll.u32 %s480, 4
          %482 = dma.done [#allocation3], %s481
        $region85: #{tpu_custom_call.1} parent=31 // loop_footer
          %s479 = sadd.s32 1, %s475
        $region86: #{tpu_custom_call.1} parent=31 // loop_footer_branch
          %474 = sbr.rel target = $region82
        $region87: #{tpu_custom_call.1} parent=31 // loop_exit
          _
        %v483 = vld [vmem:[#allocation2] sm:$0xff]
        %v484 = vld [vmem:[#allocation2 + $0x8] sm:$0xff]
        %v485 = vld [vmem:[#allocation2 + $0x10] sm:$0xff]
        %v486 = vld [vmem:[#allocation2 + $0x18] sm:$0xff]
        %v487 = vld [vmem:[#allocation2 + $0x20] sm:$0xff]
        %v488 = vld [vmem:[#allocation2 + $0x28] sm:$0xff]
        %v489 = vld [vmem:[#allocation2 + $0x30] sm:$0xff]
        %v490 = vld [vmem:[#allocation2 + $0x38] sm:$0xff]
        %v491 = vld [vmem:[#allocation2 + $0x40] sm:$0xff]
        %v492 = vld [vmem:[#allocation2 + $0x48] sm:$0xff]
        %v493 = vld [vmem:[#allocation2 + $0x50] sm:$0xff]
        %v494 = vld [vmem:[#allocation2 + $0x58] sm:$0xff]
        %v495 = vld [vmem:[#allocation2 + $0x60] sm:$0xff]
        %v496 = vld [vmem:[#allocation2 + $0x68] sm:$0xff]
        %v497 = vld [vmem:[#allocation2 + $0x70] sm:$0xff]
        %v498 = vld [vmem:[#allocation2 + $0x78] sm:$0xff]
        %v499 = vld [vmem:[#allocation2 + $0x80] sm:$0xff]
        %v500 = vld [vmem:[#allocation2 + $0x88] sm:$0xff]
        %v501 = vld [vmem:[#allocation2 + $0x90] sm:$0xff]
        %v502 = vld [vmem:[#allocation2 + $0x98] sm:$0xff]
        %v503 = vld [vmem:[#allocation2 + $0xa0] sm:$0xff]
        %v504 = vld [vmem:[#allocation2 + $0xa8] sm:$0xff]
        %v505 = vld [vmem:[#allocation2 + $0xb0] sm:$0xff]
        %v506 = vld [vmem:[#allocation2 + $0xb8] sm:$0xff]
        %v507 = vld [vmem:[#allocation2 + $0xc0] sm:$0xff]
        %v508 = vld [vmem:[#allocation2 + $0xc8] sm:$0xff]
        %v509 = vld [vmem:[#allocation2 + $0xd0] sm:$0xff]
        %v510 = vld [vmem:[#allocation2 + $0xd8] sm:$0xff]
        %v511 = vld [vmem:[#allocation2 + $0xe0] sm:$0xff]
        %v512 = vld [vmem:[#allocation2 + $0xe8] sm:$0xff]
        %v513 = vld [vmem:[#allocation2 + $0xf0] sm:$0xff]
        %v514 = vld [vmem:[#allocation2 + $0xf8] sm:$0xff]
        %v515 = vld [vmem:[#allocation2 + $0x100] sm:$0xff]
        %v516 = vld [vmem:[#allocation2 + $0x108] sm:$0xff]
        %v517 = vld [vmem:[#allocation2 + $0x110] sm:$0xff]
        %v518 = vld [vmem:[#allocation2 + $0x118] sm:$0xff]
        %v519 = vld [vmem:[#allocation2 + $0x120] sm:$0xff]
        %v520 = vld [vmem:[#allocation2 + $0x128] sm:$0xff]
        %v521 = vld [vmem:[#allocation2 + $0x130] sm:$0xff]
        %v522 = vld [vmem:[#allocation2 + $0x138] sm:$0xff]
        %v523 = vld [vmem:[#allocation2 + $0x140] sm:$0xff]
        %v524 = vld [vmem:[#allocation2 + $0x148] sm:$0xff]
        %v525 = vld [vmem:[#allocation2 + $0x150] sm:$0xff]
        %v526 = vld [vmem:[#allocation2 + $0x158] sm:$0xff]
        %v527 = vld [vmem:[#allocation2 + $0x160] sm:$0xff]
        %v528 = vld [vmem:[#allocation2 + $0x168] sm:$0xff]
        %v529 = vld [vmem:[#allocation2 + $0x170] sm:$0xff]
        %v530 = vld [vmem:[#allocation2 + $0x178] sm:$0xff]
        %v531 = vld [vmem:[#allocation2 + $0x180] sm:$0xff]
        %v532 = vld [vmem:[#allocation2 + $0x188] sm:$0xff]
        %v533 = vld [vmem:[#allocation2 + $0x190] sm:$0xff]
        %v534 = vld [vmem:[#allocation2 + $0x198] sm:$0xff]
        %v535 = vld [vmem:[#allocation2 + $0x1a0] sm:$0xff]
        %v536 = vld [vmem:[#allocation2 + $0x1a8] sm:$0xff]
        %v537 = vld [vmem:[#allocation2 + $0x1b0] sm:$0xff]
        %v538 = vld [vmem:[#allocation2 + $0x1b8] sm:$0xff]
        %v539 = vld [vmem:[#allocation2 + $0x1c0] sm:$0xff]
        %v540 = vld [vmem:[#allocation2 + $0x1c8] sm:$0xff]
        %v541 = vld [vmem:[#allocation2 + $0x1d0] sm:$0xff]
        %v542 = vld [vmem:[#allocation2 + $0x1d8] sm:$0xff]
        %v543 = vld [vmem:[#allocation2 + $0x1e0] sm:$0xff]
        %v544 = vld [vmem:[#allocation2 + $0x1e8] sm:$0xff]
        %v545 = vld [vmem:[#allocation2 + $0x1f0] sm:$0xff]
        %v546 = vld [vmem:[#allocation2 + $0x1f8] sm:$0xff]
        %v547 = vld [vmem:[#allocation2 + $0x200] sm:$0xff]
        %v548 = vld [vmem:[#allocation2 + $0x208] sm:$0xff]
        %v549 = vld [vmem:[#allocation2 + $0x210] sm:$0xff]
        %v550 = vld [vmem:[#allocation2 + $0x218] sm:$0xff]
        %v551 = vld [vmem:[#allocation2 + $0x220] sm:$0xff]
        %v552 = vld [vmem:[#allocation2 + $0x228] sm:$0xff]
        %v553 = vld [vmem:[#allocation2 + $0x230] sm:$0xff]
        %v554 = vld [vmem:[#allocation2 + $0x238] sm:$0xff]
        %v555 = vlaneseq
        %v556 = vshrl.u32 %v555, 7
        %v557 = vsub.s32 0, %v556
        %v558 = vrot.slane %v459, %v557
        %v559 = vlaneseq
        %v560 = vshrl.u32 %v559, 7
        %v561 = vsub.s32 0, %v560
        %v562 = vrot.slane %v461, %v561
        %v563 = vlaneseq
        %v564 = vshrl.u32 %v563, 7
        %v565 = vsub.s32 0, %v564
        %v566 = vrot.slane %v463, %v565
        %v567 = vlaneseq
        %v568 = vshrl.u32 %v567, 7
        %v569 = vsub.s32 0, %v568
        %v570 = vrot.slane %v465, %v569
        %v571 = vlaneseq
        %v572 = vshrl.u32 %v571, 7
        %v573 = vsub.s32 0, %v572
        %v574 = vrot.slane %v467, %v573
        %v575 = vlaneseq
        %v576 = vshrl.u32 %v575, 7
        %v577 = vsub.s32 0, %v576
        %v578 = vrot.slane %v469, %v577
        %v579 = vlaneseq
        %v580 = vshrl.u32 %v579, 7
        %v581 = vsub.s32 0, %v580
        %v582 = vrot.slane %v471, %v581
        %v583 = vlaneseq
        %v584 = vshrl.u32 %v583, 7
        %v585 = vsub.s32 0, %v584
        %v586 = vrot.slane %v473, %v585
        %v587 = vmul.f32 %v483, %v558
        %v588 = vmul.f32 %v484, %v558
        %v589 = vmul.f32 %v485, %v558
        %v590 = vmul.f32 %v486, %v558
        %v591 = vmul.f32 %v487, %v558
        %v592 = vmul.f32 %v488, %v558
        %v593 = vmul.f32 %v489, %v558
        %v594 = vmul.f32 %v490, %v558
        %v595 = vmul.f32 %v491, %v558
        %v596 = vmul.f32 %v492, %v562
        %v597 = vmul.f32 %v493, %v562
        %v598 = vmul.f32 %v494, %v562
        %v599 = vmul.f32 %v495, %v562
        %v600 = vmul.f32 %v496, %v562
        %v601 = vmul.f32 %v497, %v562
        %v602 = vmul.f32 %v498, %v562
        %v603 = vmul.f32 %v499, %v562
        %v604 = vmul.f32 %v500, %v562
        %v605 = vmul.f32 %v501, %v566
        %v606 = vmul.f32 %v502, %v566
        %v607 = vmul.f32 %v503, %v566
        %v608 = vmul.f32 %v504, %v566
        %v609 = vmul.f32 %v505, %v566
        %v610 = vmul.f32 %v506, %v566
        %v611 = vmul.f32 %v507, %v566
        %v612 = vmul.f32 %v508, %v566
        %v613 = vmul.f32 %v509, %v566
        %v614 = vmul.f32 %v510, %v570
        %v615 = vmul.f32 %v511, %v570
        %v616 = vmul.f32 %v512, %v570
        %v617 = vmul.f32 %v513, %v570
        %v618 = vmul.f32 %v514, %v570
        %v619 = vmul.f32 %v515, %v570
        %v620 = vmul.f32 %v516, %v570
        %v621 = vmul.f32 %v517, %v570
        %v622 = vmul.f32 %v518, %v570
        %v623 = vmul.f32 %v519, %v574
        %v624 = vmul.f32 %v520, %v574
        %v625 = vmul.f32 %v521, %v574
        %v626 = vmul.f32 %v522, %v574
        %v627 = vmul.f32 %v523, %v574
        %v628 = vmul.f32 %v524, %v574
        %v629 = vmul.f32 %v525, %v574
        %v630 = vmul.f32 %v526, %v574
        %v631 = vmul.f32 %v527, %v574
        %v632 = vmul.f32 %v528, %v578
        %v633 = vmul.f32 %v529, %v578
        %v634 = vmul.f32 %v530, %v578
        %v635 = vmul.f32 %v531, %v578
        %v636 = vmul.f32 %v532, %v578
        %v637 = vmul.f32 %v533, %v578
        %v638 = vmul.f32 %v534, %v578
        %v639 = vmul.f32 %v535, %v578
        %v640 = vmul.f32 %v536, %v578
        %v641 = vmul.f32 %v537, %v582
        %v642 = vmul.f32 %v538, %v582
        %v643 = vmul.f32 %v539, %v582
        %v644 = vmul.f32 %v540, %v582
        %v645 = vmul.f32 %v541, %v582
        %v646 = vmul.f32 %v542, %v582
        %v647 = vmul.f32 %v543, %v582
        %v648 = vmul.f32 %v544, %v582
        %v649 = vmul.f32 %v545, %v582
        %v650 = vmul.f32 %v546, %v586
        %v651 = vmul.f32 %v547, %v586
        %v652 = vmul.f32 %v548, %v586
        %v653 = vmul.f32 %v549, %v586
        %v654 = vmul.f32 %v550, %v586
        %v655 = vmul.f32 %v551, %v586
        %v656 = vmul.f32 %v552, %v586
        %v657 = vmul.f32 %v553, %v586
        %v658 = vmul.f32 %v554, %v586
        %659 = vadd.xlane.f32.xlu0 %v587
        %v660 = vpop.xlane.xlu0 %659
        %661 = vadd.xlane.f32.xlu0 %v588
        %v662 = vpop.xlane.xlu0 %661
        %663 = vadd.xlane.f32.xlu0 %v589
        %v664 = vpop.xlane.xlu0 %663
        %665 = vadd.xlane.f32.xlu0 %v590
        %v666 = vpop.xlane.xlu0 %665
        %667 = vadd.xlane.f32.xlu0 %v591
        %v668 = vpop.xlane.xlu0 %667
        %669 = vadd.xlane.f32.xlu0 %v592
        %v670 = vpop.xlane.xlu0 %669
        %671 = vadd.xlane.f32.xlu0 %v593
        %v672 = vpop.xlane.xlu0 %671
        %673 = vadd.xlane.f32.xlu0 %v594
        %v674 = vpop.xlane.xlu0 %673
        %675 = vadd.xlane.f32.xlu0 %v595
        %v676 = vpop.xlane.xlu0 %675
        %677 = vadd.xlane.f32.xlu0 %v596
        %v678 = vpop.xlane.xlu0 %677
        %679 = vadd.xlane.f32.xlu0 %v597
        %v680 = vpop.xlane.xlu0 %679
        %681 = vadd.xlane.f32.xlu0 %v598
        %v682 = vpop.xlane.xlu0 %681
        %683 = vadd.xlane.f32.xlu0 %v599
        %v684 = vpop.xlane.xlu0 %683
        %685 = vadd.xlane.f32.xlu0 %v600
        %v686 = vpop.xlane.xlu0 %685
        %687 = vadd.xlane.f32.xlu0 %v601
        %v688 = vpop.xlane.xlu0 %687
        %689 = vadd.xlane.f32.xlu0 %v602
        %v690 = vpop.xlane.xlu0 %689
        %691 = vadd.xlane.f32.xlu0 %v603
        %v692 = vpop.xlane.xlu0 %691
        %693 = vadd.xlane.f32.xlu0 %v604
        %v694 = vpop.xlane.xlu0 %693
        %695 = vadd.xlane.f32.xlu0 %v605
        %v696 = vpop.xlane.xlu0 %695
        %697 = vadd.xlane.f32.xlu0 %v606
        %v698 = vpop.xlane.xlu0 %697
        %699 = vadd.xlane.f32.xlu0 %v607
        %v700 = vpop.xlane.xlu0 %699
        %701 = vadd.xlane.f32.xlu0 %v608
        %v702 = vpop.xlane.xlu0 %701
        %703 = vadd.xlane.f32.xlu0 %v609
        %v704 = vpop.xlane.xlu0 %703
        %705 = vadd.xlane.f32.xlu0 %v610
        %v706 = vpop.xlane.xlu0 %705
        %707 = vadd.xlane.f32.xlu0 %v611
        %v708 = vpop.xlane.xlu0 %707
        %709 = vadd.xlane.f32.xlu0 %v612
        %v710 = vpop.xlane.xlu0 %709
        %711 = vadd.xlane.f32.xlu0 %v613
        %v712 = vpop.xlane.xlu0 %711
        %713 = vadd.xlane.f32.xlu0 %v614
        %v714 = vpop.xlane.xlu0 %713
        %715 = vadd.xlane.f32.xlu0 %v615
        %v716 = vpop.xlane.xlu0 %715
        %717 = vadd.xlane.f32.xlu0 %v616
        %v718 = vpop.xlane.xlu0 %717
        %719 = vadd.xlane.f32.xlu0 %v617
        %v720 = vpop.xlane.xlu0 %719
        %721 = vadd.xlane.f32.xlu0 %v618
        %v722 = vpop.xlane.xlu0 %721
        %723 = vadd.xlane.f32.xlu0 %v619
        %v724 = vpop.xlane.xlu0 %723
        %725 = vadd.xlane.f32.xlu0 %v620
        %v726 = vpop.xlane.xlu0 %725
        %727 = vadd.xlane.f32.xlu0 %v621
        %v728 = vpop.xlane.xlu0 %727
        %729 = vadd.xlane.f32.xlu0 %v622
        %v730 = vpop.xlane.xlu0 %729
        %731 = vadd.xlane.f32.xlu0 %v623
        %v732 = vpop.xlane.xlu0 %731
        %733 = vadd.xlane.f32.xlu0 %v624
        %v734 = vpop.xlane.xlu0 %733
        %735 = vadd.xlane.f32.xlu0 %v625
        %v736 = vpop.xlane.xlu0 %735
        %737 = vadd.xlane.f32.xlu0 %v626
        %v738 = vpop.xlane.xlu0 %737
        %739 = vadd.xlane.f32.xlu0 %v627
        %v740 = vpop.xlane.xlu0 %739
        %741 = vadd.xlane.f32.xlu0 %v628
        %v742 = vpop.xlane.xlu0 %741
        %743 = vadd.xlane.f32.xlu0 %v629
        %v744 = vpop.xlane.xlu0 %743
        %745 = vadd.xlane.f32.xlu0 %v630
        %v746 = vpop.xlane.xlu0 %745
        %747 = vadd.xlane.f32.xlu0 %v631
        %v748 = vpop.xlane.xlu0 %747
        %749 = vadd.xlane.f32.xlu0 %v632
        %v750 = vpop.xlane.xlu0 %749
        %751 = vadd.xlane.f32.xlu0 %v633
        %v752 = vpop.xlane.xlu0 %751
        %753 = vadd.xlane.f32.xlu0 %v634
        %v754 = vpop.xlane.xlu0 %753
        %755 = vadd.xlane.f32.xlu0 %v635
        %v756 = vpop.xlane.xlu0 %755
        %757 = vadd.xlane.f32.xlu0 %v636
        %v758 = vpop.xlane.xlu0 %757
        %759 = vadd.xlane.f32.xlu0 %v637
        %v760 = vpop.xlane.xlu0 %759
        %761 = vadd.xlane.f32.xlu0 %v638
        %v762 = vpop.xlane.xlu0 %761
        %763 = vadd.xlane.f32.xlu0 %v639
        %v764 = vpop.xlane.xlu0 %763
        %765 = vadd.xlane.f32.xlu0 %v640
        %v766 = vpop.xlane.xlu0 %765
        %767 = vadd.xlane.f32.xlu0 %v641
        %v768 = vpop.xlane.xlu0 %767
        %769 = vadd.xlane.f32.xlu0 %v642
        %v770 = vpop.xlane.xlu0 %769
        %771 = vadd.xlane.f32.xlu0 %v643
        %v772 = vpop.xlane.xlu0 %771
        %773 = vadd.xlane.f32.xlu0 %v644
        %v774 = vpop.xlane.xlu0 %773
        %775 = vadd.xlane.f32.xlu0 %v645
        %v776 = vpop.xlane.xlu0 %775
        %777 = vadd.xlane.f32.xlu0 %v646
        %v778 = vpop.xlane.xlu0 %777
        %779 = vadd.xlane.f32.xlu0 %v647
        %v780 = vpop.xlane.xlu0 %779
        %781 = vadd.xlane.f32.xlu0 %v648
        %v782 = vpop.xlane.xlu0 %781
        %783 = vadd.xlane.f32.xlu0 %v649
        %v784 = vpop.xlane.xlu0 %783
        %785 = vadd.xlane.f32.xlu0 %v650
        %v786 = vpop.xlane.xlu0 %785
        %787 = vadd.xlane.f32.xlu0 %v651
        %v788 = vpop.xlane.xlu0 %787
        %789 = vadd.xlane.f32.xlu0 %v652
        %v790 = vpop.xlane.xlu0 %789
        %791 = vadd.xlane.f32.xlu0 %v653
        %v792 = vpop.xlane.xlu0 %791
        %793 = vadd.xlane.f32.xlu0 %v654
        %v794 = vpop.xlane.xlu0 %793
        %795 = vadd.xlane.f32.xlu0 %v655
        %v796 = vpop.xlane.xlu0 %795
        %797 = vadd.xlane.f32.xlu0 %v656
        %v798 = vpop.xlane.xlu0 %797
        %799 = vadd.xlane.f32.xlu0 %v657
        %v800 = vpop.xlane.xlu0 %799
        %801 = vadd.xlane.f32.xlu0 %v658
        %v802 = vpop.xlane.xlu0 %801
        %vm803 = vcmp.lt.s32.totalorder %v309, 8
        %v804 = vsub.f32 0.0, %v660
        %v805 = vsub.f32 0.0, %v662
        %v806 = vsub.f32 0.0, %v664
        %v807 = vsub.f32 0.0, %v666
        %v808 = vsub.f32 0.0, %v668
        %v809 = vsub.f32 0.0, %v670
        %v810 = vsub.f32 0.0, %v672
        %v811 = vsub.f32 0.0, %v674
        %v812 = vsub.f32 0.0, %v676
        %v813 = vsub.f32 0.0, %v678
        %v814 = vsub.f32 0.0, %v680
        %v815 = vsub.f32 0.0, %v682
        %v816 = vsub.f32 0.0, %v684
        %v817 = vsub.f32 0.0, %v686
        %v818 = vsub.f32 0.0, %v688
        %v819 = vsub.f32 0.0, %v690
        %v820 = vsub.f32 0.0, %v692
        %v821 = vsub.f32 0.0, %v694
        %v822 = vsub.f32 0.0, %v696
        %v823 = vsub.f32 0.0, %v698
        %v824 = vsub.f32 0.0, %v700
        %v825 = vsub.f32 0.0, %v702
        %v826 = vsub.f32 0.0, %v704
        %v827 = vsub.f32 0.0, %v706
        %v828 = vsub.f32 0.0, %v708
        %v829 = vsub.f32 0.0, %v710
        %v830 = vsub.f32 0.0, %v712
        %v831 = vsub.f32 0.0, %v714
        %v832 = vsub.f32 0.0, %v716
        %v833 = vsub.f32 0.0, %v718
        %v834 = vsub.f32 0.0, %v720
        %v835 = vsub.f32 0.0, %v722
        %v836 = vsub.f32 0.0, %v724
        %v837 = vsub.f32 0.0, %v726
        %v838 = vsub.f32 0.0, %v728
        %v839 = vsub.f32 0.0, %v730
        %v840 = vsub.f32 0.0, %v732
        %v841 = vsub.f32 0.0, %v734
        %v842 = vsub.f32 0.0, %v736
        %v843 = vsub.f32 0.0, %v738
        %v844 = vsub.f32 0.0, %v740
        %v845 = vsub.f32 0.0, %v742
        %v846 = vsub.f32 0.0, %v744
        %v847 = vsub.f32 0.0, %v746
        %v848 = vsub.f32 0.0, %v748
        %v849 = vsub.f32 0.0, %v750
        %v850 = vsub.f32 0.0, %v752
        %v851 = vsub.f32 0.0, %v754
        %v852 = vsub.f32 0.0, %v756
        %v853 = vsub.f32 0.0, %v758
        %v854 = vsub.f32 0.0, %v760
        %v855 = vsub.f32 0.0, %v762
        %v856 = vsub.f32 0.0, %v764
        %v857 = vsub.f32 0.0, %v766
        %v858 = vsub.f32 0.0, %v768
        %v859 = vsub.f32 0.0, %v770
        %v860 = vsub.f32 0.0, %v772
        %v861 = vsub.f32 0.0, %v774
        %v862 = vsub.f32 0.0, %v776
        %v863 = vsub.f32 0.0, %v778
        %v864 = vsub.f32 0.0, %v780
        %v865 = vsub.f32 0.0, %v782
        %v866 = vsub.f32 0.0, %v784
        %v867 = vsub.f32 0.0, %v786
        %v868 = vsub.f32 0.0, %v788
        %v869 = vsub.f32 0.0, %v790
        %v870 = vsub.f32 0.0, %v792
        %v871 = vsub.f32 0.0, %v794
        %v872 = vsub.f32 0.0, %v796
        %v873 = vsub.f32 0.0, %v798
        %v874 = vsub.f32 0.0, %v800
        %v875 = vsub.f32 0.0, %v802
        %v948 = vlaneseq
        %v949 = vshrl.u32 %v948, 7
        %v950 = vsub.s32 %v309, %v949
        %v951 = vrot.slane %v804, %v950
        %v952 = vadd.s32 %v309, 4294967288
        %v953 = vlaneseq
        %v954 = vshrl.u32 %v953, 7
        %v955 = vsub.s32 %v952, %v954
        %v956 = vrot.slane %v805, %v955
        %vm957 = vcmask 130112
        %v958 = vsel %vm957, %v956, %v951
        %v959 = vadd.s32 %v309, 4294967280
        %v960 = vlaneseq
        %v961 = vshrl.u32 %v960, 7
        %v962 = vsub.s32 %v959, %v961
        %v963 = vrot.slane %v806, %v962
        %vm964 = vcmask 195712
        %v965 = vsel %vm964, %v963, %v958
        %v966 = vadd.s32 %v309, 4294967272
        %v967 = vlaneseq
        %v968 = vshrl.u32 %v967, 7
        %v969 = vsub.s32 %v966, %v968
        %v970 = vrot.slane %v807, %v969
        %vm971 = vcmask 261312
        %v972 = vsel %vm971, %v970, %v965
        %v973 = vadd.s32 %v309, 4294967264
        %v974 = vlaneseq
        %v975 = vshrl.u32 %v974, 7
        %v976 = vsub.s32 %v973, %v975
        %v977 = vrot.slane %v808, %v976
        %vm978 = vcmask 326912
        %v979 = vsel %vm978, %v977, %v972
        %v980 = vadd.s32 %v309, 4294967256
        %v981 = vlaneseq
        %v982 = vshrl.u32 %v981, 7
        %v983 = vsub.s32 %v980, %v982
        %v984 = vrot.slane %v809, %v983
        %vm985 = vcmask 392512
        %v986 = vsel %vm985, %v984, %v979
        %v987 = vadd.s32 %v309, 4294967248
        %v988 = vlaneseq
        %v989 = vshrl.u32 %v988, 7
        %v990 = vsub.s32 %v987, %v989
        %v991 = vrot.slane %v810, %v990
        %vm992 = vcmask 458112
        %v993 = vsel %vm992, %v991, %v986
        %v994 = vadd.s32 %v309, 4294967240
        %v995 = vlaneseq
        %v996 = vshrl.u32 %v995, 7
        %v997 = vsub.s32 %v994, %v996
        %v998 = vrot.slane %v811, %v997
        %vm999 = vcmask 523712
        %v1000 = vsel %vm999, %v998, %v993
        %v1001 = vadd.s32 %v309, 4294967232
        %v1002 = vlaneseq
        %v1003 = vshrl.u32 %v1002, 7
        %v1004 = vsub.s32 %v1001, %v1003
        %v1005 = vrot.slane %v812, %v1004
        %vm1006 = vcmask 589312
        %v1007 = vsel %vm1006, %v1005, %v1000
        %v1008 = vlaneseq
        %v1009 = vshrl.u32 %v1008, 7
        %v1010 = vsub.s32 %v309, %v1009
        %v1011 = vrot.slane %v813, %v1010
        %v1012 = vlaneseq
        %v1013 = vshrl.u32 %v1012, 7
        %v1014 = vsub.s32 %v952, %v1013
        %v1015 = vrot.slane %v814, %v1014
        %v1016 = vsel %vm957, %v1015, %v1011
        %v1017 = vlaneseq
        %v1018 = vshrl.u32 %v1017, 7
        %v1019 = vsub.s32 %v959, %v1018
        %v1020 = vrot.slane %v815, %v1019
        %v1021 = vsel %vm964, %v1020, %v1016
        %v1022 = vlaneseq
        %v1023 = vshrl.u32 %v1022, 7
        %v1024 = vsub.s32 %v966, %v1023
        %v1025 = vrot.slane %v816, %v1024
        %v1026 = vsel %vm971, %v1025, %v1021
        %v1027 = vlaneseq
        %v1028 = vshrl.u32 %v1027, 7
        %v1029 = vsub.s32 %v973, %v1028
        %v1030 = vrot.slane %v817, %v1029
        %v1031 = vsel %vm978, %v1030, %v1026
        %v1032 = vlaneseq
        %v1033 = vshrl.u32 %v1032, 7
        %v1034 = vsub.s32 %v980, %v1033
        %v1035 = vrot.slane %v818, %v1034
        %v1036 = vsel %vm985, %v1035, %v1031
        %v1037 = vlaneseq
        %v1038 = vshrl.u32 %v1037, 7
        %v1039 = vsub.s32 %v987, %v1038
        %v1040 = vrot.slane %v819, %v1039
        %v1041 = vsel %vm992, %v1040, %v1036
        %v1042 = vlaneseq
        %v1043 = vshrl.u32 %v1042, 7
        %v1044 = vsub.s32 %v994, %v1043
        %v1045 = vrot.slane %v820, %v1044
        %v1046 = vsel %vm999, %v1045, %v1041
        %v1047 = vlaneseq
        %v1048 = vshrl.u32 %v1047, 7
        %v1049 = vsub.s32 %v1001, %v1048
        %v1050 = vrot.slane %v821, %v1049
        %v1051 = vsel %vm1006, %v1050, %v1046
        %v1052 = vlaneseq
        %v1053 = vshrl.u32 %v1052, 7
        %v1054 = vsub.s32 %v309, %v1053
        %v1055 = vrot.slane %v822, %v1054
        %v1056 = vlaneseq
        %v1057 = vshrl.u32 %v1056, 7
        %v1058 = vsub.s32 %v952, %v1057
        %v1059 = vrot.slane %v823, %v1058
        %v1060 = vsel %vm957, %v1059, %v1055
        %v1061 = vlaneseq
        %v1062 = vshrl.u32 %v1061, 7
        %v1063 = vsub.s32 %v959, %v1062
        %v1064 = vrot.slane %v824, %v1063
        %v1065 = vsel %vm964, %v1064, %v1060
        %v1066 = vlaneseq
        %v1067 = vshrl.u32 %v1066, 7
        %v1068 = vsub.s32 %v966, %v1067
        %v1069 = vrot.slane %v825, %v1068
        %v1070 = vsel %vm971, %v1069, %v1065
        %v1071 = vlaneseq
        %v1072 = vshrl.u32 %v1071, 7
        %v1073 = vsub.s32 %v973, %v1072
        %v1074 = vrot.slane %v826, %v1073
        %v1075 = vsel %vm978, %v1074, %v1070
        %v1076 = vlaneseq
        %v1077 = vshrl.u32 %v1076, 7
        %v1078 = vsub.s32 %v980, %v1077
        %v1079 = vrot.slane %v827, %v1078
        %v1080 = vsel %vm985, %v1079, %v1075
        %v1081 = vlaneseq
        %v1082 = vshrl.u32 %v1081, 7
        %v1083 = vsub.s32 %v987, %v1082
        %v1084 = vrot.slane %v828, %v1083
        %v1085 = vsel %vm992, %v1084, %v1080
        %v1086 = vlaneseq
        %v1087 = vshrl.u32 %v1086, 7
        %v1088 = vsub.s32 %v994, %v1087
        %v1089 = vrot.slane %v829, %v1088
        %v1090 = vsel %vm999, %v1089, %v1085
        %v1091 = vlaneseq
        %v1092 = vshrl.u32 %v1091, 7
        %v1093 = vsub.s32 %v1001, %v1092
        %v1094 = vrot.slane %v830, %v1093
        %v1095 = vsel %vm1006, %v1094, %v1090
        %v1096 = vlaneseq
        %v1097 = vshrl.u32 %v1096, 7
        %v1098 = vsub.s32 %v309, %v1097
        %v1099 = vrot.slane %v831, %v1098
        %v1100 = vlaneseq
        %v1101 = vshrl.u32 %v1100, 7
        %v1102 = vsub.s32 %v952, %v1101
        %v1103 = vrot.slane %v832, %v1102
        %v1104 = vsel %vm957, %v1103, %v1099
        %v1105 = vlaneseq
        %v1106 = vshrl.u32 %v1105, 7
        %v1107 = vsub.s32 %v959, %v1106
        %v1108 = vrot.slane %v833, %v1107
        %v1109 = vsel %vm964, %v1108, %v1104
        %v1110 = vlaneseq
        %v1111 = vshrl.u32 %v1110, 7
        %v1112 = vsub.s32 %v966, %v1111
        %v1113 = vrot.slane %v834, %v1112
        %v1114 = vsel %vm971, %v1113, %v1109
        %v1115 = vlaneseq
        %v1116 = vshrl.u32 %v1115, 7
        %v1117 = vsub.s32 %v973, %v1116
        %v1118 = vrot.slane %v835, %v1117
        %v1119 = vsel %vm978, %v1118, %v1114
        %v1120 = vlaneseq
        %v1121 = vshrl.u32 %v1120, 7
        %v1122 = vsub.s32 %v980, %v1121
        %v1123 = vrot.slane %v836, %v1122
        %v1124 = vsel %vm985, %v1123, %v1119
        %v1125 = vlaneseq
        %v1126 = vshrl.u32 %v1125, 7
        %v1127 = vsub.s32 %v987, %v1126
        %v1128 = vrot.slane %v837, %v1127
        %v1129 = vsel %vm992, %v1128, %v1124
        %v1130 = vlaneseq
        %v1131 = vshrl.u32 %v1130, 7
        %v1132 = vsub.s32 %v994, %v1131
        %v1133 = vrot.slane %v838, %v1132
        %v1134 = vsel %vm999, %v1133, %v1129
        %v1135 = vlaneseq
        %v1136 = vshrl.u32 %v1135, 7
        %v1137 = vsub.s32 %v1001, %v1136
        %v1138 = vrot.slane %v839, %v1137
        %v1139 = vsel %vm1006, %v1138, %v1134
        %v1140 = vlaneseq
        %v1141 = vshrl.u32 %v1140, 7
        %v1142 = vsub.s32 %v309, %v1141
        %v1143 = vrot.slane %v840, %v1142
        %v1144 = vlaneseq
        %v1145 = vshrl.u32 %v1144, 7
        %v1146 = vsub.s32 %v952, %v1145
        %v1147 = vrot.slane %v841, %v1146
        %v1148 = vsel %vm957, %v1147, %v1143
        %v1149 = vlaneseq
        %v1150 = vshrl.u32 %v1149, 7
        %v1151 = vsub.s32 %v959, %v1150
        %v1152 = vrot.slane %v842, %v1151
        %v1153 = vsel %vm964, %v1152, %v1148
        %v1154 = vlaneseq
        %v1155 = vshrl.u32 %v1154, 7
        %v1156 = vsub.s32 %v966, %v1155
        %v1157 = vrot.slane %v843, %v1156
        %v1158 = vsel %vm971, %v1157, %v1153
        %v1159 = vlaneseq
        %v1160 = vshrl.u32 %v1159, 7
        %v1161 = vsub.s32 %v973, %v1160
        %v1162 = vrot.slane %v844, %v1161
        %v1163 = vsel %vm978, %v1162, %v1158
        %v1164 = vlaneseq
        %v1165 = vshrl.u32 %v1164, 7
        %v1166 = vsub.s32 %v980, %v1165
        %v1167 = vrot.slane %v845, %v1166
        %v1168 = vsel %vm985, %v1167, %v1163
        %v1169 = vlaneseq
        %v1170 = vshrl.u32 %v1169, 7
        %v1171 = vsub.s32 %v987, %v1170
        %v1172 = vrot.slane %v846, %v1171
        %v1173 = vsel %vm992, %v1172, %v1168
        %v1174 = vlaneseq
        %v1175 = vshrl.u32 %v1174, 7
        %v1176 = vsub.s32 %v994, %v1175
        %v1177 = vrot.slane %v847, %v1176
        %v1178 = vsel %vm999, %v1177, %v1173
        %v1179 = vlaneseq
        %v1180 = vshrl.u32 %v1179, 7
        %v1181 = vsub.s32 %v1001, %v1180
        %v1182 = vrot.slane %v848, %v1181
        %v1183 = vsel %vm1006, %v1182, %v1178
        %v1184 = vlaneseq
        %v1185 = vshrl.u32 %v1184, 7
        %v1186 = vsub.s32 %v309, %v1185
        %v1187 = vrot.slane %v849, %v1186
        %v1188 = vlaneseq
        %v1189 = vshrl.u32 %v1188, 7
        %v1190 = vsub.s32 %v952, %v1189
        %v1191 = vrot.slane %v850, %v1190
        %v1192 = vsel %vm957, %v1191, %v1187
        %v1193 = vlaneseq
        %v1194 = vshrl.u32 %v1193, 7
        %v1195 = vsub.s32 %v959, %v1194
        %v1196 = vrot.slane %v851, %v1195
        %v1197 = vsel %vm964, %v1196, %v1192
        %v1198 = vlaneseq
        %v1199 = vshrl.u32 %v1198, 7
        %v1200 = vsub.s32 %v966, %v1199
        %v1201 = vrot.slane %v852, %v1200
        %v1202 = vsel %vm971, %v1201, %v1197
        %v1203 = vlaneseq
        %v1204 = vshrl.u32 %v1203, 7
        %v1205 = vsub.s32 %v973, %v1204
        %v1206 = vrot.slane %v853, %v1205
        %v1207 = vsel %vm978, %v1206, %v1202
        %v1208 = vlaneseq
        %v1209 = vshrl.u32 %v1208, 7
        %v1210 = vsub.s32 %v980, %v1209
        %v1211 = vrot.slane %v854, %v1210
        %v1212 = vsel %vm985, %v1211, %v1207
        %v1213 = vlaneseq
        %v1214 = vshrl.u32 %v1213, 7
        %v1215 = vsub.s32 %v987, %v1214
        %v1216 = vrot.slane %v855, %v1215
        %v1217 = vsel %vm992, %v1216, %v1212
        %v1218 = vlaneseq
        %v1219 = vshrl.u32 %v1218, 7
        %v1220 = vsub.s32 %v994, %v1219
        %v1221 = vrot.slane %v856, %v1220
        %v1222 = vsel %vm999, %v1221, %v1217
        %v1223 = vlaneseq
        %v1224 = vshrl.u32 %v1223, 7
        %v1225 = vsub.s32 %v1001, %v1224
        %v1226 = vrot.slane %v857, %v1225
        %v1227 = vsel %vm1006, %v1226, %v1222
        %v1228 = vlaneseq
        %v1229 = vshrl.u32 %v1228, 7
        %v1230 = vsub.s32 %v309, %v1229
        %v1231 = vrot.slane %v858, %v1230
        %v1232 = vlaneseq
        %v1233 = vshrl.u32 %v1232, 7
        %v1234 = vsub.s32 %v952, %v1233
        %v1235 = vrot.slane %v859, %v1234
        %v1236 = vsel %vm957, %v1235, %v1231
        %v1237 = vlaneseq
        %v1238 = vshrl.u32 %v1237, 7
        %v1239 = vsub.s32 %v959, %v1238
        %v1240 = vrot.slane %v860, %v1239
        %v1241 = vsel %vm964, %v1240, %v1236
        %v1242 = vlaneseq
        %v1243 = vshrl.u32 %v1242, 7
        %v1244 = vsub.s32 %v966, %v1243
        %v1245 = vrot.slane %v861, %v1244
        %v1246 = vsel %vm971, %v1245, %v1241
        %v1247 = vlaneseq
        %v1248 = vshrl.u32 %v1247, 7
        %v1249 = vsub.s32 %v973, %v1248
        %v1250 = vrot.slane %v862, %v1249
        %v1251 = vsel %vm978, %v1250, %v1246
        %v1252 = vlaneseq
        %v1253 = vshrl.u32 %v1252, 7
        %v1254 = vsub.s32 %v980, %v1253
        %v1255 = vrot.slane %v863, %v1254
        %v1256 = vsel %vm985, %v1255, %v1251
        %v1257 = vlaneseq
        %v1258 = vshrl.u32 %v1257, 7
        %v1259 = vsub.s32 %v987, %v1258
        %v1260 = vrot.slane %v864, %v1259
        %v1261 = vsel %vm992, %v1260, %v1256
        %v1262 = vlaneseq
        %v1263 = vshrl.u32 %v1262, 7
        %v1264 = vsub.s32 %v994, %v1263
        %v1265 = vrot.slane %v865, %v1264
        %v1266 = vsel %vm999, %v1265, %v1261
        %v1267 = vlaneseq
        %v1268 = vshrl.u32 %v1267, 7
        %v1269 = vsub.s32 %v1001, %v1268
        %v1270 = vrot.slane %v866, %v1269
        %v1271 = vsel %vm1006, %v1270, %v1266
        %v1272 = vlaneseq
        %v1273 = vshrl.u32 %v1272, 7
        %v1274 = vsub.s32 %v309, %v1273
        %v1275 = vrot.slane %v867, %v1274
        %v1276 = vlaneseq
        %v1277 = vshrl.u32 %v1276, 7
        %v1278 = vsub.s32 %v952, %v1277
        %v1279 = vrot.slane %v868, %v1278
        %v1280 = vsel %vm957, %v1279, %v1275
        %v1281 = vlaneseq
        %v1282 = vshrl.u32 %v1281, 7
        %v1283 = vsub.s32 %v959, %v1282
        %v1284 = vrot.slane %v869, %v1283
        %v1285 = vsel %vm964, %v1284, %v1280
        %v1286 = vlaneseq
        %v1287 = vshrl.u32 %v1286, 7
        %v1288 = vsub.s32 %v966, %v1287
        %v1289 = vrot.slane %v870, %v1288
        %v1290 = vsel %vm971, %v1289, %v1285
        %v1291 = vlaneseq
        %v1292 = vshrl.u32 %v1291, 7
        %v1293 = vsub.s32 %v973, %v1292
        %v1294 = vrot.slane %v871, %v1293
        %v1295 = vsel %vm978, %v1294, %v1290
        %v1296 = vlaneseq
        %v1297 = vshrl.u32 %v1296, 7
        %v1298 = vsub.s32 %v980, %v1297
        %v1299 = vrot.slane %v872, %v1298
        %v1300 = vsel %vm985, %v1299, %v1295
        %v1301 = vlaneseq
        %v1302 = vshrl.u32 %v1301, 7
        %v1303 = vsub.s32 %v987, %v1302
        %v1304 = vrot.slane %v873, %v1303
        %v1305 = vsel %vm992, %v1304, %v1300
        %v1306 = vlaneseq
        %v1307 = vshrl.u32 %v1306, 7
        %v1308 = vsub.s32 %v994, %v1307
        %v1309 = vrot.slane %v874, %v1308
        %v1310 = vsel %vm999, %v1309, %v1305
        %v1311 = vlaneseq
        %v1312 = vshrl.u32 %v1311, 7
        %v1313 = vsub.s32 %v1001, %v1312
        %v1314 = vrot.slane %v875, %v1313
        %v1315 = vsel %vm1006, %v1314, %v1310
        %vm1316 = vcmask 1041409
        %v1317 = vsel %vm1316, %v1051, %v1007
        %vm1318 = vcmask 1042434
        %v1319 = vsel %vm1318, %v1095, %v1317
        %vm1320 = vcmask 1043459
        %v1321 = vsel %vm1320, %v1139, %v1319
        %vm1322 = vcmask 1044484
        %v1323 = vsel %vm1322, %v1183, %v1321
        %vm1324 = vcmask 1045509
        %v1325 = vsel %vm1324, %v1227, %v1323
        %vm1326 = vcmask 1046534
        %v1327 = vsel %vm1326, %v1271, %v1325
        %vm1328 = vcmask 1047559
        %v1329 = vsel %vm1328, %v1315, %v1327
        %v1403 = vlaneseq
        %v1404 = vshrl.u32 %v1403, 7
        %v1405 = vsub.s32 %v309, %v1404
        %v1406 = vrot.slane %v660, %v1405
        %v1407 = vlaneseq
        %v1408 = vshrl.u32 %v1407, 7
        %v1409 = vsub.s32 %v952, %v1408
        %v1410 = vrot.slane %v662, %v1409
        %v1411 = vsel %vm957, %v1410, %v1406
        %v1412 = vlaneseq
        %v1413 = vshrl.u32 %v1412, 7
        %v1414 = vsub.s32 %v959, %v1413
        %v1415 = vrot.slane %v664, %v1414
        %v1416 = vsel %vm964, %v1415, %v1411
        %v1417 = vlaneseq
        %v1418 = vshrl.u32 %v1417, 7
        %v1419 = vsub.s32 %v966, %v1418
        %v1420 = vrot.slane %v666, %v1419
        %v1421 = vsel %vm971, %v1420, %v1416
        %v1422 = vlaneseq
        %v1423 = vshrl.u32 %v1422, 7
        %v1424 = vsub.s32 %v973, %v1423
        %v1425 = vrot.slane %v668, %v1424
        %v1426 = vsel %vm978, %v1425, %v1421
        %v1427 = vlaneseq
        %v1428 = vshrl.u32 %v1427, 7
        %v1429 = vsub.s32 %v980, %v1428
        %v1430 = vrot.slane %v670, %v1429
        %v1431 = vsel %vm985, %v1430, %v1426
        %v1432 = vlaneseq
        %v1433 = vshrl.u32 %v1432, 7
        %v1434 = vsub.s32 %v987, %v1433
        %v1435 = vrot.slane %v672, %v1434
        %v1436 = vsel %vm992, %v1435, %v1431
        %v1437 = vlaneseq
        %v1438 = vshrl.u32 %v1437, 7
        %v1439 = vsub.s32 %v994, %v1438
        %v1440 = vrot.slane %v674, %v1439
        %v1441 = vsel %vm999, %v1440, %v1436
        %v1442 = vlaneseq
        %v1443 = vshrl.u32 %v1442, 7
        %v1444 = vsub.s32 %v1001, %v1443
        %v1445 = vrot.slane %v676, %v1444
        %v1446 = vsel %vm1006, %v1445, %v1441
        %v1447 = vlaneseq
        %v1448 = vshrl.u32 %v1447, 7
        %v1449 = vsub.s32 %v309, %v1448
        %v1450 = vrot.slane %v678, %v1449
        %v1451 = vlaneseq
        %v1452 = vshrl.u32 %v1451, 7
        %v1453 = vsub.s32 %v952, %v1452
        %v1454 = vrot.slane %v680, %v1453
        %v1455 = vsel %vm957, %v1454, %v1450
        %v1456 = vlaneseq
        %v1457 = vshrl.u32 %v1456, 7
        %v1458 = vsub.s32 %v959, %v1457
        %v1459 = vrot.slane %v682, %v1458
        %v1460 = vsel %vm964, %v1459, %v1455
        %v1461 = vlaneseq
        %v1462 = vshrl.u32 %v1461, 7
        %v1463 = vsub.s32 %v966, %v1462
        %v1464 = vrot.slane %v684, %v1463
        %v1465 = vsel %vm971, %v1464, %v1460
        %v1466 = vlaneseq
        %v1467 = vshrl.u32 %v1466, 7
        %v1468 = vsub.s32 %v973, %v1467
        %v1469 = vrot.slane %v686, %v1468
        %v1470 = vsel %vm978, %v1469, %v1465
        %v1471 = vlaneseq
        %v1472 = vshrl.u32 %v1471, 7
        %v1473 = vsub.s32 %v980, %v1472
        %v1474 = vrot.slane %v688, %v1473
        %v1475 = vsel %vm985, %v1474, %v1470
        %v1476 = vlaneseq
        %v1477 = vshrl.u32 %v1476, 7
        %v1478 = vsub.s32 %v987, %v1477
        %v1479 = vrot.slane %v690, %v1478
        %v1480 = vsel %vm992, %v1479, %v1475
        %v1481 = vlaneseq
        %v1482 = vshrl.u32 %v1481, 7
        %v1483 = vsub.s32 %v994, %v1482
        %v1484 = vrot.slane %v692, %v1483
        %v1485 = vsel %vm999, %v1484, %v1480
        %v1486 = vlaneseq
        %v1487 = vshrl.u32 %v1486, 7
        %v1488 = vsub.s32 %v1001, %v1487
        %v1489 = vrot.slane %v694, %v1488
        %v1490 = vsel %vm1006, %v1489, %v1485
        %v1491 = vlaneseq
        %v1492 = vshrl.u32 %v1491, 7
        %v1493 = vsub.s32 %v309, %v1492
        %v1494 = vrot.slane %v696, %v1493
        %v1495 = vlaneseq
        %v1496 = vshrl.u32 %v1495, 7
        %v1497 = vsub.s32 %v952, %v1496
        %v1498 = vrot.slane %v698, %v1497
        %v1499 = vsel %vm957, %v1498, %v1494
        %v1500 = vlaneseq
        %v1501 = vshrl.u32 %v1500, 7
        %v1502 = vsub.s32 %v959, %v1501
        %v1503 = vrot.slane %v700, %v1502
        %v1504 = vsel %vm964, %v1503, %v1499
        %v1505 = vlaneseq
        %v1506 = vshrl.u32 %v1505, 7
        %v1507 = vsub.s32 %v966, %v1506
        %v1508 = vrot.slane %v702, %v1507
        %v1509 = vsel %vm971, %v1508, %v1504
        %v1510 = vlaneseq
        %v1511 = vshrl.u32 %v1510, 7
        %v1512 = vsub.s32 %v973, %v1511
        %v1513 = vrot.slane %v704, %v1512
        %v1514 = vsel %vm978, %v1513, %v1509
        %v1515 = vlaneseq
        %v1516 = vshrl.u32 %v1515, 7
        %v1517 = vsub.s32 %v980, %v1516
        %v1518 = vrot.slane %v706, %v1517
        %v1519 = vsel %vm985, %v1518, %v1514
        %v1520 = vlaneseq
        %v1521 = vshrl.u32 %v1520, 7
        %v1522 = vsub.s32 %v987, %v1521
        %v1523 = vrot.slane %v708, %v1522
        %v1524 = vsel %vm992, %v1523, %v1519
        %v1525 = vlaneseq
        %v1526 = vshrl.u32 %v1525, 7
        %v1527 = vsub.s32 %v994, %v1526
        %v1528 = vrot.slane %v710, %v1527
        %v1529 = vsel %vm999, %v1528, %v1524
        %v1530 = vlaneseq
        %v1531 = vshrl.u32 %v1530, 7
        %v1532 = vsub.s32 %v1001, %v1531
        %v1533 = vrot.slane %v712, %v1532
        %v1534 = vsel %vm1006, %v1533, %v1529
        %v1535 = vlaneseq
        %v1536 = vshrl.u32 %v1535, 7
        %v1537 = vsub.s32 %v309, %v1536
        %v1538 = vrot.slane %v714, %v1537
        %v1539 = vlaneseq
        %v1540 = vshrl.u32 %v1539, 7
        %v1541 = vsub.s32 %v952, %v1540
        %v1542 = vrot.slane %v716, %v1541
        %v1543 = vsel %vm957, %v1542, %v1538
        %v1544 = vlaneseq
        %v1545 = vshrl.u32 %v1544, 7
        %v1546 = vsub.s32 %v959, %v1545
        %v1547 = vrot.slane %v718, %v1546
        %v1548 = vsel %vm964, %v1547, %v1543
        %v1549 = vlaneseq
        %v1550 = vshrl.u32 %v1549, 7
        %v1551 = vsub.s32 %v966, %v1550
        %v1552 = vrot.slane %v720, %v1551
        %v1553 = vsel %vm971, %v1552, %v1548
        %v1554 = vlaneseq
        %v1555 = vshrl.u32 %v1554, 7
        %v1556 = vsub.s32 %v973, %v1555
        %v1557 = vrot.slane %v722, %v1556
        %v1558 = vsel %vm978, %v1557, %v1553
        %v1559 = vlaneseq
        %v1560 = vshrl.u32 %v1559, 7
        %v1561 = vsub.s32 %v980, %v1560
        %v1562 = vrot.slane %v724, %v1561
        %v1563 = vsel %vm985, %v1562, %v1558
        %v1564 = vlaneseq
        %v1565 = vshrl.u32 %v1564, 7
        %v1566 = vsub.s32 %v987, %v1565
        %v1567 = vrot.slane %v726, %v1566
        %v1568 = vsel %vm992, %v1567, %v1563
        %v1569 = vlaneseq
        %v1570 = vshrl.u32 %v1569, 7
        %v1571 = vsub.s32 %v994, %v1570
        %v1572 = vrot.slane %v728, %v1571
        %v1573 = vsel %vm999, %v1572, %v1568
        %v1574 = vlaneseq
        %v1575 = vshrl.u32 %v1574, 7
        %v1576 = vsub.s32 %v1001, %v1575
        %v1577 = vrot.slane %v730, %v1576
        %v1578 = vsel %vm1006, %v1577, %v1573
        %v1579 = vlaneseq
        %v1580 = vshrl.u32 %v1579, 7
        %v1581 = vsub.s32 %v309, %v1580
        %v1582 = vrot.slane %v732, %v1581
        %v1583 = vlaneseq
        %v1584 = vshrl.u32 %v1583, 7
        %v1585 = vsub.s32 %v952, %v1584
        %v1586 = vrot.slane %v734, %v1585
        %v1587 = vsel %vm957, %v1586, %v1582
        %v1588 = vlaneseq
        %v1589 = vshrl.u32 %v1588, 7
        %v1590 = vsub.s32 %v959, %v1589
        %v1591 = vrot.slane %v736, %v1590
        %v1592 = vsel %vm964, %v1591, %v1587
        %v1593 = vlaneseq
        %v1594 = vshrl.u32 %v1593, 7
        %v1595 = vsub.s32 %v966, %v1594
        %v1596 = vrot.slane %v738, %v1595
        %v1597 = vsel %vm971, %v1596, %v1592
        %v1598 = vlaneseq
        %v1599 = vshrl.u32 %v1598, 7
        %v1600 = vsub.s32 %v973, %v1599
        %v1601 = vrot.slane %v740, %v1600
        %v1602 = vsel %vm978, %v1601, %v1597
        %v1603 = vlaneseq
        %v1604 = vshrl.u32 %v1603, 7
        %v1605 = vsub.s32 %v980, %v1604
        %v1606 = vrot.slane %v742, %v1605
        %v1607 = vsel %vm985, %v1606, %v1602
        %v1608 = vlaneseq
        %v1609 = vshrl.u32 %v1608, 7
        %v1610 = vsub.s32 %v987, %v1609
        %v1611 = vrot.slane %v744, %v1610
        %v1612 = vsel %vm992, %v1611, %v1607
        %v1613 = vlaneseq
        %v1614 = vshrl.u32 %v1613, 7
        %v1615 = vsub.s32 %v994, %v1614
        %v1616 = vrot.slane %v746, %v1615
        %v1617 = vsel %vm999, %v1616, %v1612
        %v1618 = vlaneseq
        %v1619 = vshrl.u32 %v1618, 7
        %v1620 = vsub.s32 %v1001, %v1619
        %v1621 = vrot.slane %v748, %v1620
        %v1622 = vsel %vm1006, %v1621, %v1617
        %v1623 = vlaneseq
        %v1624 = vshrl.u32 %v1623, 7
        %v1625 = vsub.s32 %v309, %v1624
        %v1626 = vrot.slane %v750, %v1625
        %v1627 = vlaneseq
        %v1628 = vshrl.u32 %v1627, 7
        %v1629 = vsub.s32 %v952, %v1628
        %v1630 = vrot.slane %v752, %v1629
        %v1631 = vsel %vm957, %v1630, %v1626
        %v1632 = vlaneseq
        %v1633 = vshrl.u32 %v1632, 7
        %v1634 = vsub.s32 %v959, %v1633
        %v1635 = vrot.slane %v754, %v1634
        %v1636 = vsel %vm964, %v1635, %v1631
        %v1637 = vlaneseq
        %v1638 = vshrl.u32 %v1637, 7
        %v1639 = vsub.s32 %v966, %v1638
        %v1640 = vrot.slane %v756, %v1639
        %v1641 = vsel %vm971, %v1640, %v1636
        %v1642 = vlaneseq
        %v1643 = vshrl.u32 %v1642, 7
        %v1644 = vsub.s32 %v973, %v1643
        %v1645 = vrot.slane %v758, %v1644
        %v1646 = vsel %vm978, %v1645, %v1641
        %v1647 = vlaneseq
        %v1648 = vshrl.u32 %v1647, 7
        %v1649 = vsub.s32 %v980, %v1648
        %v1650 = vrot.slane %v760, %v1649
        %v1651 = vsel %vm985, %v1650, %v1646
        %v1652 = vlaneseq
        %v1653 = vshrl.u32 %v1652, 7
        %v1654 = vsub.s32 %v987, %v1653
        %v1655 = vrot.slane %v762, %v1654
        %v1656 = vsel %vm992, %v1655, %v1651
        %v1657 = vlaneseq
        %v1658 = vshrl.u32 %v1657, 7
        %v1659 = vsub.s32 %v994, %v1658
        %v1660 = vrot.slane %v764, %v1659
        %v1661 = vsel %vm999, %v1660, %v1656
        %v1662 = vlaneseq
        %v1663 = vshrl.u32 %v1662, 7
        %v1664 = vsub.s32 %v1001, %v1663
        %v1665 = vrot.slane %v766, %v1664
        %v1666 = vsel %vm1006, %v1665, %v1661
        %v1667 = vlaneseq
        %v1668 = vshrl.u32 %v1667, 7
        %v1669 = vsub.s32 %v309, %v1668
        %v1670 = vrot.slane %v768, %v1669
        %v1671 = vlaneseq
        %v1672 = vshrl.u32 %v1671, 7
        %v1673 = vsub.s32 %v952, %v1672
        %v1674 = vrot.slane %v770, %v1673
        %v1675 = vsel %vm957, %v1674, %v1670
        %v1676 = vlaneseq
        %v1677 = vshrl.u32 %v1676, 7
        %v1678 = vsub.s32 %v959, %v1677
        %v1679 = vrot.slane %v772, %v1678
        %v1680 = vsel %vm964, %v1679, %v1675
        %v1681 = vlaneseq
        %v1682 = vshrl.u32 %v1681, 7
        %v1683 = vsub.s32 %v966, %v1682
        %v1684 = vrot.slane %v774, %v1683
        %v1685 = vsel %vm971, %v1684, %v1680
        %v1686 = vlaneseq
        %v1687 = vshrl.u32 %v1686, 7
        %v1688 = vsub.s32 %v973, %v1687
        %v1689 = vrot.slane %v776, %v1688
        %v1690 = vsel %vm978, %v1689, %v1685
        %v1691 = vlaneseq
        %v1692 = vshrl.u32 %v1691, 7
        %v1693 = vsub.s32 %v980, %v1692
        %v1694 = vrot.slane %v778, %v1693
        %v1695 = vsel %vm985, %v1694, %v1690
        %v1696 = vlaneseq
        %v1697 = vshrl.u32 %v1696, 7
        %v1698 = vsub.s32 %v987, %v1697
        %v1699 = vrot.slane %v780, %v1698
        %v1700 = vsel %vm992, %v1699, %v1695
        %v1701 = vlaneseq
        %v1702 = vshrl.u32 %v1701, 7
        %v1703 = vsub.s32 %v994, %v1702
        %v1704 = vrot.slane %v782, %v1703
        %v1705 = vsel %vm999, %v1704, %v1700
        %v1706 = vlaneseq
        %v1707 = vshrl.u32 %v1706, 7
        %v1708 = vsub.s32 %v1001, %v1707
        %v1709 = vrot.slane %v784, %v1708
        %v1710 = vsel %vm1006, %v1709, %v1705
        %v1711 = vlaneseq
        %v1712 = vshrl.u32 %v1711, 7
        %v1713 = vsub.s32 %v309, %v1712
        %v1714 = vrot.slane %v786, %v1713
        %v1715 = vlaneseq
        %v1716 = vshrl.u32 %v1715, 7
        %v1717 = vsub.s32 %v952, %v1716
        %v1718 = vrot.slane %v788, %v1717
        %v1719 = vsel %vm957, %v1718, %v1714
        %v1720 = vlaneseq
        %v1721 = vshrl.u32 %v1720, 7
        %v1722 = vsub.s32 %v959, %v1721
        %v1723 = vrot.slane %v790, %v1722
        %v1724 = vsel %vm964, %v1723, %v1719
        %v1725 = vlaneseq
        %v1726 = vshrl.u32 %v1725, 7
        %v1727 = vsub.s32 %v966, %v1726
        %v1728 = vrot.slane %v792, %v1727
        %v1729 = vsel %vm971, %v1728, %v1724
        %v1730 = vlaneseq
        %v1731 = vshrl.u32 %v1730, 7
        %v1732 = vsub.s32 %v973, %v1731
        %v1733 = vrot.slane %v794, %v1732
        %v1734 = vsel %vm978, %v1733, %v1729
        %v1735 = vlaneseq
        %v1736 = vshrl.u32 %v1735, 7
        %v1737 = vsub.s32 %v980, %v1736
        %v1738 = vrot.slane %v796, %v1737
        %v1739 = vsel %vm985, %v1738, %v1734
        %v1740 = vlaneseq
        %v1741 = vshrl.u32 %v1740, 7
        %v1742 = vsub.s32 %v987, %v1741
        %v1743 = vrot.slane %v798, %v1742
        %v1744 = vsel %vm992, %v1743, %v1739
        %v1745 = vlaneseq
        %v1746 = vshrl.u32 %v1745, 7
        %v1747 = vsub.s32 %v994, %v1746
        %v1748 = vrot.slane %v800, %v1747
        %v1749 = vsel %vm999, %v1748, %v1744
        %v1750 = vlaneseq
        %v1751 = vshrl.u32 %v1750, 7
        %v1752 = vsub.s32 %v1001, %v1751
        %v1753 = vrot.slane %v802, %v1752
        %v1754 = vsel %vm1006, %v1753, %v1749
        %v1755 = vsel %vm1316, %v1490, %v1446
        %v1756 = vsel %vm1318, %v1534, %v1755
        %v1757 = vsel %vm1320, %v1578, %v1756
        %v1758 = vsel %vm1322, %v1622, %v1757
        %v1759 = vsel %vm1324, %v1666, %v1758
        %v1760 = vsel %vm1326, %v1710, %v1759
        %v1761 = vsel %vm1328, %v1754, %v1760
        %v1763 = vsel %vm803, %v1329, %v1761
        %v1764 = vmax.f32 %v1763, 0.0
        %v1765 = vand.u32 2147483647, %v1763
        %v1766 = vsub.f32 0.0, %v1765
        %v1767 = vmul.f32 %v1766, 1.442695
        %v1768 = vpow.pop %v1767
        %v1769 = vadd.f32 %v1768, 1.0
        %v1770 = vlog2.pop %v1769
        %v1771 = vmul.f32 %v1770, 0.6931472
        %v1772 = vmul.f32 -0.5, %v1768
        %v1773 = vadd.f32 %v1772, 1.0
        %v1774 = vmul.f32 %v1773, %v1768
        %v1775 = vand.u32 2147483647, %v1768
        %vm1776 = vcmp.lt.f32.partialorder %v1775, 0.0004427343
        %v1777 = vsel %vm1776, %v1774, %v1771
        %v1778 = vadd.f32 %v1764, %v1777
        %v1779 = vld [vmem:[%s228] sm:$0xff]
        %vm1780 = vcmp.ne.s32.totalorder %v1779, 0
        %v1781 = vsel %vm1780, 1, 0
        %v1782 = vcvt.s32.f32 %v1781
        %1784 = vrot.lane.b32.xlu0 %v1782, 8
        %v1785 = vpop.permute.xlu0 %1784
        %1787 = vrot.lane.b32.xlu0 %v1782, 16
        %v1788 = vpop.permute.xlu0 %1787
        %1790 = vrot.lane.b32.xlu0 %v1782, 24
        %v1791 = vpop.permute.xlu0 %1790
        %1793 = vrot.lane.b32.xlu0 %v1782, 32
        %v1794 = vpop.permute.xlu0 %1793
        %1796 = vrot.lane.b32.xlu0 %v1782, 40
        %v1797 = vpop.permute.xlu0 %1796
        %1799 = vrot.lane.b32.xlu0 %v1782, 48
        %v1800 = vpop.permute.xlu0 %1799
        %1802 = vrot.lane.b32.xlu0 %v1782, 56
        %v1803 = vpop.permute.xlu0 %1802
        %1805 = vrot.lane.b32.xlu0 %v1782, 64
        %v1806 = vpop.permute.xlu0 %1805
        %vm1808 = vcmask 64512
        %v1809 = vsel %vm1808, %v1782, %v1785
        %vm1810 = vcmask 130048
        %v1811 = vsel %vm1810, %v1809, %v1788
        %vm1812 = vcmask 195584
        %v1813 = vsel %vm1812, %v1811, %v1791
        %vm1814 = vcmask 261120
        %v1815 = vsel %vm1814, %v1813, %v1794
        %vm1816 = vcmask 326656
        %v1817 = vsel %vm1816, %v1815, %v1797
        %vm1818 = vcmask 392192
        %v1819 = vsel %vm1818, %v1817, %v1800
        %vm1820 = vcmask 457728
        %v1821 = vsel %vm1820, %v1819, %v1803
        %vm1822 = vcmask 523264
        %v1823 = vsel %vm1822, %v1821, %v1806
        %v1824 = vmul.f32 %v1778, %v1823
        %vm1825 = vcmask 588800
        %v1826 = vsel %vm1825, %v1824, 0.0
        %1827 = vadd.xlane.f32.xlu0 %v1826
        %v1828 = vpop.xlane.xlu0 %1827
        %v1829 = vrot.slane %v1828, 4
        %v1830 = vadd.f32 %v1828, %v1829
        %v1831 = vrot.slane %v1830, 2
        %v1832 = vadd.f32 %v1830, %v1831
        %v1833 = vrot.slane %v1832, 1
        %v1834 = vadd.f32 %v1832, %v1833
        %s1835 = vtos %v1834
        %v1836 = vstv %s1835
        %1837 = vst [vmem:[%s219] sm:$0x1] %v1836
        %s1838 = sand.u32 %s112, 1
        %s1839 = scalar_lea.sflag [#allocation8], %s1838
        %s1840 = sand.u32 %s112, 1
        %s1841 = scalar_lea.vmem [#allocation9], %s1840
        // Predicated region
        $region88: #{tpu_custom_call.1} parent=31 // pred_check
          %p1842 = pneg %p122
        $region89: #{tpu_custom_call.1} parent=31 // pred_check_branch
          %1844 = sbr.rel (%p1842) target = $region91
        $region90: #{tpu_custom_call.1} parent=31 // pred_region
          %s1846 = ssub.s32 16, 16
          %1847 = vsyncadd %s1839, %s1846
          %s1848 = smul.addr %s26, 16
          %s1849 = scalar_lea.hbm %s5, %s1848
          %s1851 = sshll.u32 %s1841, 4
          %s1852 = int_to_ptr.vmem [resolvable:$true] %s1851
          %1854 = dma.vmem_to_hbm [thread:$0]  %s1852, 16, %s1849, %s1839
        $region91: #{tpu_custom_call.1} parent=31 // pred_fallthru
          _
      $region32: #{tpu_custom_call.1} parent=5 // pred_fallthru
        _
      %p1855 = scmp.le.s32.totalorder 2, %s21
      // Predicated region
      $region92: #{tpu_custom_call.1} parent=5 // pred_check
        %p1856 = pneg %p1855
      $region93: #{tpu_custom_call.1} parent=5 // pred_check_branch
        %1858 = sbr.rel (%p1856) target = $region95
      $region94: #{tpu_custom_call.1} parent=5 // pred_region
        %s1859 = ssub.s32 %s21, 2
        // Predicated region
        $region96: #{tpu_custom_call.1} parent=94 // pred_check
          %p1860 = pneg %p128
        $region97: #{tpu_custom_call.1} parent=94 // pred_check_branch
          %1862 = sbr.rel (%p1860) target = $region99
        $region98: #{tpu_custom_call.1} parent=94 // pred_region
          %s1863 = sand.u32 %s113, 1
          %s1864 = scalar_lea.sflag [#allocation8], %s1863
          %s1865 = sand.u32 %s113, 1
          %s1866 = scalar_lea.vmem [#allocation9], %s1865
          %1867 = dma.done %s1864, 16
        $region99: #{tpu_custom_call.1} parent=94 // pred_fallthru
          _
      $region95: #{tpu_custom_call.1} parent=5 // pred_fallthru
        _
    $region6: #{tpu_custom_call.1} parent=1 // loop_footer
      %s25 = sadd.s32 1, %s21
    $region7: #{tpu_custom_call.1} parent=1 // loop_footer_branch
      %20 = sbr.rel target = $region3
    $region8: #{tpu_custom_call.1} parent=1 // loop_exit
      _
    %1868 = vsyncpa [#allocation7], 1
    %s1869 = scalar_lea.sflag [#allocation7], 1
    %1870 = vsyncpa %s1869, 1
    %1871 = vsyncpa [#allocation8], 1
    %s1872 = scalar_lea.sflag [#allocation8], 1
    %1873 = vsyncpa %s1872, 1
  %1874 = vsyncmov [#allocation3]
  %s1875 = vpop.sfrf %1874
  %p1876 = scmp.eq.s32.totalorder %s1875, 0
  %p1877 = pneg %p1876
  %1879 = shalt.err (%p1877)

</llo_original>
